<compile_context>
chip_gen: v6e
topology: v6e:2x2x1
jax: 0.10.0
libtpu: 0.0.40
codegen_flags: <defaults>
</compile_context>

<pallas_src>
import functools

import jax
import jax.numpy as jnp
from jax.experimental import pallas as pl
from jax.experimental.pallas import tpu as pltpu


def _round_up(x, m):
    return (x + m - 1) // m * m


def _sigmoid_via_tanh(z):
    # sigmoid(z) = 0.5 * (tanh(0.5 * z) + 1): one EUP op for the whole slab.
    return 0.5 * jnp.tanh(0.5 * z) + 0.5


def _lstm_recur_kernel(pg_ref, whh_ref, out_ref, h_scr, c_scr, *, hp, tb):
    """Sequential recurrence over one time-chunk of TB steps.

    pg_ref : (TB, Bp, 4*Hp)  pre-computed input projections (+ bias), f32,
                             gate-block layout [i | f | o | g]
    whh_ref: (Hp, 4*Hp)      recurrent weight, same gate-block layout
    out_ref: (TB, Bp, Hp)    hidden state per step (lane-dense, sublane-dense store)
    h_scr/c_scr: (Bp, Hp)    f32 carries, persist across grid iterations
    """
    tc = pl.program_id(0)

    # h0 = c0 = 0 (matches torch.zeros init in SequenceModule.forward)
    @pl.when(tc == 0)
    def _():
        h_scr[...] = jnp.zeros_like(h_scr)
        c_scr[...] = jnp.zeros_like(c_scr)

    whh = whh_ref[...]          # resident across all grid steps
    h = h_scr[...]
    c = c_scr[...]

    # Fully-unrolled inner loop over the TB timesteps of this chunk.  Static indices ->
    # dense vector loads/stores; the recurrence itself is the only serial dependence.
    for s in range(tb):
        gates = pg_ref[s] + jnp.dot(h.astype(whh.dtype), whh,
                                    preferred_element_type=jnp.float32)
        # Gate layout [i | f | o | g]: one sigmoid over the contiguous 3*Hp slab.
        ifo = _sigmoid_via_tanh(gates[:, 0:3 * hp])
        g_g = jnp.tanh(gates[:, 3 * hp:4 * hp])
        i_g = ifo[:, 0 * hp:1 * hp]
        f_g = ifo[:, 1 * hp:2 * hp]
        o_g = ifo[:, 2 * hp:3 * hp]

        c = f_g * c + i_g * g_g
        h = o_g * jnp.tanh(c)
        out_ref[s] = h.astype(out_ref.dtype)

    h_scr[...] = h
    c_scr[...] = c


def lstm_pallas(x, w_ih, w_hh, b_ih, b_hh, *, time_block=16,
                compute_dtype=jnp.float32):
    """Single-layer unidirectional LSTM, batch_first (zero initial state).

    x:    [B, T, I]
    w_ih: [4H, I], w_hh: [4H, H], b_ih/b_hh: [4H]  (PyTorch layout, gate order i,f,g,o)
    Returns out: [B, T, H]  (h_t for every timestep).
    """
    B, T, I = x.shape
    H = w_hh.shape[1]
    Hp = _round_up(H, 128)        # lane-aligned hidden size
    Bp = _round_up(B, 8)          # sublane-aligned batch
    G = 4 * Hp                    # 4 gate blocks, each 128-lane aligned

    f32 = jnp.float32
    w_ih = jnp.asarray(w_ih, f32)
    w_hh = jnp.asarray(w_hh, f32)
    bias = jnp.asarray(b_ih, f32) + jnp.asarray(b_hh, f32)

    # Gate-block-aligned, zero-padded weights.  PyTorch gate order is (i, f, g, o);
    # we place them in kernel order [i | f | o | g] so sigmoid covers one 3*Hp slab.
    # Zero padding guarantees the padded columns of h/c remain exactly 0.
    block_of = (0, 1, 3, 2)       # original gate k -> kernel gate block
    wih_p = jnp.zeros((G, I), f32)
    whh_p = jnp.zeros((Hp, G), f32)
    bias_p = jnp.zeros((G,), f32)
    for k in range(4):
        kb = block_of[k]
        wih_p = wih_p.at[kb * Hp:kb * Hp + H, :].set(w_ih[k * H:(k + 1) * H, :])
        whh_p = whh_p.at[:H, kb * Hp:kb * Hp + H].set(w_hh[k * H:(k + 1) * H, :].T)
        bias_p = bias_p.at[kb * Hp:kb * Hp + H].set(bias[k * H:(k + 1) * H])

    # Time-axis chunking.
    tb = min(time_block, T)
    Tp = _round_up(T, tb)
    n_chunks = Tp // tb

    # ---- Stage 1 (parallel): hoisted input projection for all T steps at once.
    # One big MXU matmul, emitted directly in time-major layout; bias folded in.
    pregates = jnp.einsum(
        "bti,gi->tbg",
        x.astype(compute_dtype), wih_p.astype(compute_dtype),
        preferred_element_type=jnp.float32) + bias_p[None, None, :]
    if Tp != T or Bp != B:
        # Padded trailing steps / batch rows only produce outputs discarded below.
        pregates = jnp.pad(pregates, ((0, Tp - T), (0, Bp - B), (0, 0)))

    whh_c = whh_p.astype(compute_dtype)

    # ---- Stage 2 (sequential): recurrence, chunked over time.
    # NOTE(v7x): for very large H, additionally tile whh across an inner pipeline so the
    # resident weight fits the 64 MiB VMEM.
    kernel = functools.partial(_lstm_recur_kernel, hp=Hp, tb=tb)

    out_tm = pl.pallas_call(
        kernel,
        out_shape=jax.ShapeDtypeStruct((Tp, Bp, Hp), f32),
        grid_spec=pltpu.PrefetchScalarGridSpec(
            num_scalar_prefetch=0,
            grid=(n_chunks,),
            in_specs=[
                # one time-chunk of pre-gates per grid step
                pl.BlockSpec((tb, Bp, G), lambda tc: (tc, 0, 0)),
                # recurrent weight resident across all iterations
                pl.BlockSpec((Hp, G), lambda tc: (0, 0)),
            ],
            out_specs=pl.BlockSpec((tb, Bp, Hp), lambda tc: (tc, 0, 0)),
            scratch_shapes=[
                pltpu.VMEM((Bp, Hp), jnp.float32),   # h carry
                pltpu.VMEM((Bp, Hp), jnp.float32),   # c carry
            ],
        ),
        compiler_params=pltpu.CompilerParams(
            dimension_semantics=("arbitrary",),      # time recurrence is sequential
        ),
    )(pregates, whh_c)

    # Back to batch_first and drop batch/hidden padding (small XLA copy).
    out = jnp.transpose(out_tm[:T, :B, :H], (1, 0, 2))
    return out.astype(x.dtype)


def lstm_ref(x, w_ih, w_hh, b_ih, b_hh):
    """Pure-JAX reference matching torch.nn.LSTM (1 layer, unidirectional)."""
    H = w_hh.shape[1]
    wih_t = w_ih.T
    whh_t = w_hh.T
    b = b_ih + b_hh

    def step(carry, xt):
        h, c = carry
        gates = xt @ wih_t + h @ whh_t + b
        i = jax.nn.sigmoid(gates[:, 0 * H:1 * H])
        f = jax.nn.sigmoid(gates[:, 1 * H:2 * H])
        g = jnp.tanh(gates[:, 2 * H:3 * H])
        o = jax.nn.sigmoid(gates[:, 3 * H:4 * H])
        c = f * c + i * g
        h = o * jnp.tanh(c)
        return (h, c), h

    B = x.shape[0]
    h0 = jnp.zeros((B, H), jnp.float32)
    c0 = jnp.zeros((B, H), jnp.float32)
    _, hs = jax.lax.scan(step, (h0, c0), jnp.transpose(x, (1, 0, 2)))
    return jnp.transpose(hs, (1, 0, 2))


if __name__ == "__main__":
    B, T, IN, HID = 2, 8, 16, 32

    key = jax.random.PRNGKey(0)
    kx, k1, k2, k3, k4 = jax.random.split(key, 5)

    # PyTorch-style init: uniform(-1/sqrt(H), 1/sqrt(H)), deterministic here.
    bound = 1.0 / jnp.sqrt(jnp.float32(HID))
    x = jax.random.normal(kx, (B, T, IN), jnp.float32)
    w_ih = jax.random.uniform(k1, (4 * HID, IN), jnp.float32, -bound, bound)
    w_hh = jax.random.uniform(k2, (4 * HID, HID), jnp.float32, -bound, bound)
    b_ih = jax.random.uniform(k3, (4 * HID,), jnp.float32, -bound, bound)
    b_hh = jax.random.uniform(k4, (4 * HID,), jnp.float32, -bound, bound)

    out = lstm_pallas(x, w_ih, w_hh, b_ih, b_hh)
    out = jax.block_until_ready(out)

    ref = lstm_ref(x, w_ih, w_hh, b_ih, b_hh)
    assert out.shape == (B, T, HID)
    max_err = float(jnp.max(jnp.abs(out - ref)))
    assert jnp.allclose(out, ref, atol=5e-5, rtol=5e-5), \
        f"mismatch vs reference (max |err|={max_err})"

    print("KERNEL_OK")
</pallas_src>

<mosaic_0001>
module attributes {stable_mosaic.version = 11 : i64} {
  func.func @_lstm_recur_kernel(%arg0: i32, %arg1: memref<8x8x512xf32, #tpu.memory_space<vmem>>, %arg2: memref<128x512xf32, #tpu.memory_space<vmem>>, %arg3: memref<8x8x128xf32, #tpu.memory_space<vmem>>, %arg4: memref<8x128xf32, #tpu.memory_space<vmem>>, %arg5: memref<8x128xf32, #tpu.memory_space<vmem>>) attributes {dimension_semantics = [#tpu.dimension_semantics<arbitrary>], iteration_bounds = array<i64: 1>, scalar_prefetch = 0 : i64, scratch_operands = 2 : i64, tpu.core_type = #tpu.core_type<tc>, window_params = [{transform_indices = @transform_0, window_bounds = array<i64: 8, 8, 512>}, {pipeline_mode = #tpu.pipeline_mode<synchronous>, transform_indices = @transform_1, window_bounds = array<i64: 128, 512>}, {transform_indices = @transform_2, window_bounds = array<i64: 8, 8, 128>}]} {
    %c0_i32 = arith.constant 0 : i32
    %0 = arith.cmpi eq, %arg0, %c0_i32 : i32
    %1 = arith.extui %0 : i1 to i32
    %c0_i32_0 = arith.constant 0 : i32
    %2 = arith.cmpi ne, %1, %c0_i32_0 : i32
    scf.if %2 {
      %cst_82 = arith.constant 0.000000e+00 : f32
      %208 = vector.broadcast %cst_82 : f32 to vector<8x128xf32>
      %c0_83 = arith.constant 0 : index
      %c0_84 = arith.constant 0 : index
      %209 = vector.load %arg4[%c0_83, %c0_84] : memref<8x128xf32, #tpu.memory_space<vmem>>, vector<8x128xf32>
      tpu.vector_store %arg4[%c0_83, %c0_84], %208 {strides = array<i32>} : memref<8x128xf32, #tpu.memory_space<vmem>>, vector<8x128xf32>,
      %cst_85 = arith.constant 0.000000e+00 : f32
      %210 = vector.broadcast %cst_85 : f32 to vector<8x128xf32>
      %c0_86 = arith.constant 0 : index
      %c0_87 = arith.constant 0 : index
      %211 = vector.load %arg5[%c0_86, %c0_87] : memref<8x128xf32, #tpu.memory_space<vmem>>, vector<8x128xf32>
      tpu.vector_store %arg5[%c0_86, %c0_87], %210 {strides = array<i32>} : memref<8x128xf32, #tpu.memory_space<vmem>>, vector<8x128xf32>,
    } else {
    }
    %c0 = arith.constant 0 : index
    %c0_1 = arith.constant 0 : index
    %3 = vector.load %arg2[%c0, %c0_1] : memref<128x512xf32, #tpu.memory_space<vmem>>, vector<128x512xf32>
    %c0_2 = arith.constant 0 : index
    %c0_3 = arith.constant 0 : index
    %4 = vector.load %arg4[%c0_2, %c0_3] : memref<8x128xf32, #tpu.memory_space<vmem>>, vector<8x128xf32>
    %c0_4 = arith.constant 0 : index
    %c0_5 = arith.constant 0 : index
    %5 = vector.load %arg5[%c0_4, %c0_5] : memref<8x128xf32, #tpu.memory_space<vmem>>, vector<8x128xf32>
    %c0_6 = arith.constant 0 : index
    %c0_7 = arith.constant 0 : index
    %c0_8 = arith.constant 0 : index
    %6 = vector.load %arg1[%c0_6, %c0_7, %c0_8] : memref<8x8x512xf32, #tpu.memory_space<vmem>>, vector<1x8x512xf32>
    %7 = vector.shape_cast %6 : vector<1x8x512xf32> to vector<8x512xf32>
    %cst = arith.constant dense<0.000000e+00> : vector<8x512xf32>
    %8 = tpu.matmul %4, %3, %cst {dimension_numbers = #tpu.dot_dimension_numbers<[1], [0], [0], [1], [0, 0, 1, 1], [], []>} : vector<8x128xf32>, vector<128x512xf32>, vector<8x512xf32> -> vector<8x512xf32>
    %9 = arith.addf %7, %8 : vector<8x512xf32>
    %10 = vector.extract_strided_slice %9 {offsets = [0, 0], sizes = [8, 384], strides = [1, 1]} : vector<8x512xf32> to vector<8x384xf32>
    %cst_9 = arith.constant 5.000000e-01 : f32
    %11 = vector.broadcast %cst_9 : f32 to vector<8x384xf32>
    %12 = arith.mulf %11, %10 : vector<8x384xf32>
    %13 = math.tanh %12 : vector<8x384xf32>
    %cst_10 = arith.constant 5.000000e-01 : f32
    %14 = vector.broadcast %cst_10 : f32 to vector<8x384xf32>
    %15 = arith.mulf %14, %13 : vector<8x384xf32>
    %cst_11 = arith.constant 5.000000e-01 : f32
    %16 = vector.broadcast %cst_11 : f32 to vector<8x384xf32>
    %17 = arith.addf %15, %16 : vector<8x384xf32>
    %18 = vector.extract_strided_slice %9 {offsets = [0, 384], sizes = [8, 128], strides = [1, 1]} : vector<8x512xf32> to vector<8x128xf32>
    %19 = math.tanh %18 : vector<8x128xf32>
    %20 = vector.extract_strided_slice %17 {offsets = [0, 0], sizes = [8, 128], strides = [1, 1]} : vector<8x384xf32> to vector<8x128xf32>
    %21 = vector.extract_strided_slice %17 {offsets = [0, 128], sizes = [8, 128], strides = [1, 1]} : vector<8x384xf32> to vector<8x128xf32>
    %22 = vector.extract_strided_slice %17 {offsets = [0, 256], sizes = [8, 128], strides = [1, 1]} : vector<8x384xf32> to vector<8x128xf32>
    %23 = arith.mulf %21, %5 : vector<8x128xf32>
    %24 = arith.mulf %20, %19 : vector<8x128xf32>
    %25 = arith.addf %23, %24 : vector<8x128xf32>
    %26 = math.tanh %25 : vector<8x128xf32>
    %27 = arith.mulf %22, %26 : vector<8x128xf32>
    %c0_12 = arith.constant 0 : index
    %c0_13 = arith.constant 0 : index
    %c0_14 = arith.constant 0 : index
    %28 = vector.load %arg3[%c0_12, %c0_13, %c0_14] : memref<8x8x128xf32, #tpu.memory_space<vmem>>, vector<1x8x128xf32>
    %29 = vector.shape_cast %28 : vector<1x8x128xf32> to vector<8x128xf32>
    %30 = vector.shape_cast %27 : vector<8x128xf32> to vector<1x8x128xf32>
    tpu.vector_store %arg3[%c0_12, %c0_13, %c0_14], %30 {strides = array<i32>} : memref<8x8x128xf32, #tpu.memory_space<vmem>>, vector<1x8x128xf32>,
    %c1 = arith.constant 1 : index
    %c0_15 = arith.constant 0 : index
    %c0_16 = arith.constant 0 : index
    %31 = vector.load %arg1[%c1, %c0_15, %c0_16] : memref<8x8x512xf32, #tpu.memory_space<vmem>>, vector<1x8x512xf32>
    %32 = vector.shape_cast %31 : vector<1x8x512xf32> to vector<8x512xf32>
    %cst_17 = arith.constant dense<0.000000e+00> : vector<8x512xf32>
    %33 = tpu.matmul %27, %3, %cst_17 {dimension_numbers = #tpu.dot_dimension_numbers<[1], [0], [0], [1], [0, 0, 1, 1], [], []>} : vector<8x128xf32>, vector<128x512xf32>, vector<8x512xf32> -> vector<8x512xf32>
    %34 = arith.addf %32, %33 : vector<8x512xf32>
    %35 = vector.extract_strided_slice %34 {offsets = [0, 0], sizes = [8, 384], strides = [1, 1]} : vector<8x512xf32> to vector<8x384xf32>
    %cst_18 = arith.constant 5.000000e-01 : f32
    %36 = vector.broadcast %cst_18 : f32 to vector<8x384xf32>
    %37 = arith.mulf %36, %35 : vector<8x384xf32>
    %38 = math.tanh %37 : vector<8x384xf32>
    %cst_19 = arith.constant 5.000000e-01 : f32
    %39 = vector.broadcast %cst_19 : f32 to vector<8x384xf32>
    %40 = arith.mulf %39, %38 : vector<8x384xf32>
    %cst_20 = arith.constant 5.000000e-01 : f32
    %41 = vector.broadcast %cst_20 : f32 to vector<8x384xf32>
    %42 = arith.addf %40, %41 : vector<8x384xf32>
    %43 = vector.extract_strided_slice %34 {offsets = [0, 384], sizes = [8, 128], strides = [1, 1]} : vector<8x512xf32> to vector<8x128xf32>
    %44 = math.tanh %43 : vector<8x128xf32>
    %45 = vector.extract_strided_slice %42 {offsets = [0, 0], sizes = [8, 128], strides = [1, 1]} : vector<8x384xf32> to vector<8x128xf32>
    %46 = vector.extract_strided_slice %42 {offsets = [0, 128], sizes = [8, 128], strides = [1, 1]} : vector<8x384xf32> to vector<8x128xf32>
    %47 = vector.extract_strided_slice %42 {offsets = [0, 256], sizes = [8, 128], strides = [1, 1]} : vector<8x384xf32> to vector<8x128xf32>
    %48 = arith.mulf %46, %25 : vector<8x128xf32>
    %49 = arith.mulf %45, %44 : vector<8x128xf32>
    %50 = arith.addf %48, %49 : vector<8x128xf32>
    %51 = math.tanh %50 : vector<8x128xf32>
    %52 = arith.mulf %47, %51 : vector<8x128xf32>
    %c1_21 = arith.constant 1 : index
    %c0_22 = arith.constant 0 : index
    %c0_23 = arith.constant 0 : index
    %53 = vector.load %arg3[%c1_21, %c0_22, %c0_23] : memref<8x8x128xf32, #tpu.memory_space<vmem>>, vector<1x8x128xf32>
    %54 = vector.shape_cast %53 : vector<1x8x128xf32> to vector<8x128xf32>
    %55 = vector.shape_cast %52 : vector<8x128xf32> to vector<1x8x128xf32>
    tpu.vector_store %arg3[%c1_21, %c0_22, %c0_23], %55 {strides = array<i32>} : memref<8x8x128xf32, #tpu.memory_space<vmem>>, vector<1x8x128xf32>,
    %c2 = arith.constant 2 : index
    %c0_24 = arith.constant 0 : index
    %c0_25 = arith.constant 0 : index
    %56 = vector.load %arg1[%c2, %c0_24, %c0_25] : memref<8x8x512xf32, #tpu.memory_space<vmem>>, vector<1x8x512xf32>
    %57 = vector.shape_cast %56 : vector<1x8x512xf32> to vector<8x512xf32>
    %cst_26 = arith.constant dense<0.000000e+00> : vector<8x512xf32>
    %58 = tpu.matmul %52, %3, %cst_26 {dimension_numbers = #tpu.dot_dimension_numbers<[1], [0], [0], [1], [0, 0, 1, 1], [], []>} : vector<8x128xf32>, vector<128x512xf32>, vector<8x512xf32> -> vector<8x512xf32>
    %59 = arith.addf %57, %58 : vector<8x512xf32>
    %60 = vector.extract_strided_slice %59 {offsets = [0, 0], sizes = [8, 384], strides = [1, 1]} : vector<8x512xf32> to vector<8x384xf32>
    %cst_27 = arith.constant 5.000000e-01 : f32
    %61 = vector.broadcast %cst_27 : f32 to vector<8x384xf32>
    %62 = arith.mulf %61, %60 : vector<8x384xf32>
    %63 = math.tanh %62 : vector<8x384xf32>
    %cst_28 = arith.constant 5.000000e-01 : f32
    %64 = vector.broadcast %cst_28 : f32 to vector<8x384xf32>
    %65 = arith.mulf %64, %63 : vector<8x384xf32>
    %cst_29 = arith.constant 5.000000e-01 : f32
    %66 = vector.broadcast %cst_29 : f32 to vector<8x384xf32>
    %67 = arith.addf %65, %66 : vector<8x384xf32>
    %68 = vector.extract_strided_slice %59 {offsets = [0, 384], sizes = [8, 128], strides = [1, 1]} : vector<8x512xf32> to vector<8x128xf32>
    %69 = math.tanh %68 : vector<8x128xf32>
    %70 = vector.extract_strided_slice %67 {offsets = [0, 0], sizes = [8, 128], strides = [1, 1]} : vector<8x384xf32> to vector<8x128xf32>
    %71 = vector.extract_strided_slice %67 {offsets = [0, 128], sizes = [8, 128], strides = [1, 1]} : vector<8x384xf32> to vector<8x128xf32>
    %72 = vector.extract_strided_slice %67 {offsets = [0, 256], sizes = [8, 128], strides = [1, 1]} : vector<8x384xf32> to vector<8x128xf32>
    %73 = arith.mulf %71, %50 : vector<8x128xf32>
    %74 = arith.mulf %70, %69 : vector<8x128xf32>
    %75 = arith.addf %73, %74 : vector<8x128xf32>
    %76 = math.tanh %75 : vector<8x128xf32>
    %77 = arith.mulf %72, %76 : vector<8x128xf32>
    %c2_30 = arith.constant 2 : index
    %c0_31 = arith.constant 0 : index
    %c0_32 = arith.constant 0 : index
    %78 = vector.load %arg3[%c2_30, %c0_31, %c0_32] : memref<8x8x128xf32, #tpu.memory_space<vmem>>, vector<1x8x128xf32>
    %79 = vector.shape_cast %78 : vector<1x8x128xf32> to vector<8x128xf32>
    %80 = vector.shape_cast %77 : vector<8x128xf32> to vector<1x8x128xf32>
    tpu.vector_store %arg3[%c2_30, %c0_31, %c0_32], %80 {strides = array<i32>} : memref<8x8x128xf32, #tpu.memory_space<vmem>>, vector<1x8x128xf32>,
    %c3 = arith.constant 3 : index
    %c0_33 = arith.constant 0 : index
    %c0_34 = arith.constant 0 : index
    %81 = vector.load %arg1[%c3, %c0_33, %c0_34] : memref<8x8x512xf32, #tpu.memory_space<vmem>>, vector<1x8x512xf32>
    %82 = vector.shape_cast %81 : vector<1x8x512xf32> to vector<8x512xf32>
    %cst_35 = arith.constant dense<0.000000e+00> : vector<8x512xf32>
    %83 = tpu.matmul %77, %3, %cst_35 {dimension_numbers = #tpu.dot_dimension_numbers<[1], [0], [0], [1], [0, 0, 1, 1], [], []>} : vector<8x128xf32>, vector<128x512xf32>, vector<8x512xf32> -> vector<8x512xf32>
    %84 = arith.addf %82, %83 : vector<8x512xf32>
    %85 = vector.extract_strided_slice %84 {offsets = [0, 0], sizes = [8, 384], strides = [1, 1]} : vector<8x512xf32> to vector<8x384xf32>
    %cst_36 = arith.constant 5.000000e-01 : f32
    %86 = vector.broadcast %cst_36 : f32 to vector<8x384xf32>
    %87 = arith.mulf %86, %85 : vector<8x384xf32>
    %88 = math.tanh %87 : vector<8x384xf32>
    %cst_37 = arith.constant 5.000000e-01 : f32
    %89 = vector.broadcast %cst_37 : f32 to vector<8x384xf32>
    %90 = arith.mulf %89, %88 : vector<8x384xf32>
    %cst_38 = arith.constant 5.000000e-01 : f32
    %91 = vector.broadcast %cst_38 : f32 to vector<8x384xf32>
    %92 = arith.addf %90, %91 : vector<8x384xf32>
    %93 = vector.extract_strided_slice %84 {offsets = [0, 384], sizes = [8, 128], strides = [1, 1]} : vector<8x512xf32> to vector<8x128xf32>
    %94 = math.tanh %93 : vector<8x128xf32>
    %95 = vector.extract_strided_slice %92 {offsets = [0, 0], sizes = [8, 128], strides = [1, 1]} : vector<8x384xf32> to vector<8x128xf32>
    %96 = vector.extract_strided_slice %92 {offsets = [0, 128], sizes = [8, 128], strides = [1, 1]} : vector<8x384xf32> to vector<8x128xf32>
    %97 = vector.extract_strided_slice %92 {offsets = [0, 256], sizes = [8, 128], strides = [1, 1]} : vector<8x384xf32> to vector<8x128xf32>
    %98 = arith.mulf %96, %75 : vector<8x128xf32>
    %99 = arith.mulf %95, %94 : vector<8x128xf32>
    %100 = arith.addf %98, %99 : vector<8x128xf32>
    %101 = math.tanh %100 : vector<8x128xf32>
    %102 = arith.mulf %97, %101 : vector<8x128xf32>
    %c3_39 = arith.constant 3 : index
    %c0_40 = arith.constant 0 : index
    %c0_41 = arith.constant 0 : index
    %103 = vector.load %arg3[%c3_39, %c0_40, %c0_41] : memref<8x8x128xf32, #tpu.memory_space<vmem>>, vector<1x8x128xf32>
    %104 = vector.shape_cast %103 : vector<1x8x128xf32> to vector<8x128xf32>
    %105 = vector.shape_cast %102 : vector<8x128xf32> to vector<1x8x128xf32>
    tpu.vector_store %arg3[%c3_39, %c0_40, %c0_41], %105 {strides = array<i32>} : memref<8x8x128xf32, #tpu.memory_space<vmem>>, vector<1x8x128xf32>,
    %c4 = arith.constant 4 : index
    %c0_42 = arith.constant 0 : index
    %c0_43 = arith.constant 0 : index
    %106 = vector.load %arg1[%c4, %c0_42, %c0_43] : memref<8x8x512xf32, #tpu.memory_space<vmem>>, vector<1x8x512xf32>
    %107 = vector.shape_cast %106 : vector<1x8x512xf32> to vector<8x512xf32>
    %cst_44 = arith.constant dense<0.000000e+00> : vector<8x512xf32>
    %108 = tpu.matmul %102, %3, %cst_44 {dimension_numbers = #tpu.dot_dimension_numbers<[1], [0], [0], [1], [0, 0, 1, 1], [], []>} : vector<8x128xf32>, vector<128x512xf32>, vector<8x512xf32> -> vector<8x512xf32>
    %109 = arith.addf %107, %108 : vector<8x512xf32>
    %110 = vector.extract_strided_slice %109 {offsets = [0, 0], sizes = [8, 384], strides = [1, 1]} : vector<8x512xf32> to vector<8x384xf32>
    %cst_45 = arith.constant 5.000000e-01 : f32
    %111 = vector.broadcast %cst_45 : f32 to vector<8x384xf32>
    %112 = arith.mulf %111, %110 : vector<8x384xf32>
    %113 = math.tanh %112 : vector<8x384xf32>
    %cst_46 = arith.constant 5.000000e-01 : f32
    %114 = vector.broadcast %cst_46 : f32 to vector<8x384xf32>
    %115 = arith.mulf %114, %113 : vector<8x384xf32>
    %cst_47 = arith.constant 5.000000e-01 : f32
    %116 = vector.broadcast %cst_47 : f32 to vector<8x384xf32>
    %117 = arith.addf %115, %116 : vector<8x384xf32>
    %118 = vector.extract_strided_slice %109 {offsets = [0, 384], sizes = [8, 128], strides = [1, 1]} : vector<8x512xf32> to vector<8x128xf32>
    %119 = math.tanh %118 : vector<8x128xf32>
    %120 = vector.extract_strided_slice %117 {offsets = [0, 0], sizes = [8, 128], strides = [1, 1]} : vector<8x384xf32> to vector<8x128xf32>
    %121 = vector.extract_strided_slice %117 {offsets = [0, 128], sizes = [8, 128], strides = [1, 1]} : vector<8x384xf32> to vector<8x128xf32>
    %122 = vector.extract_strided_slice %117 {offsets = [0, 256], sizes = [8, 128], strides = [1, 1]} : vector<8x384xf32> to vector<8x128xf32>
    %123 = arith.mulf %121, %100 : vector<8x128xf32>
    %124 = arith.mulf %120, %119 : vector<8x128xf32>
    %125 = arith.addf %123, %124 : vector<8x128xf32>
    %126 = math.tanh %125 : vector<8x128xf32>
    %127 = arith.mulf %122, %126 : vector<8x128xf32>
    %c4_48 = arith.constant 4 : index
    %c0_49 = arith.constant 0 : index
    %c0_50 = arith.constant 0 : index
    %128 = vector.load %arg3[%c4_48, %c0_49, %c0_50] : memref<8x8x128xf32, #tpu.memory_space<vmem>>, vector<1x8x128xf32>
    %129 = vector.shape_cast %128 : vector<1x8x128xf32> to vector<8x128xf32>
    %130 = vector.shape_cast %127 : vector<8x128xf32> to vector<1x8x128xf32>
    tpu.vector_store %arg3[%c4_48, %c0_49, %c0_50], %130 {strides = array<i32>} : memref<8x8x128xf32, #tpu.memory_space<vmem>>, vector<1x8x128xf32>,
    %c5 = arith.constant 5 : index
    %c0_51 = arith.constant 0 : index
    %c0_52 = arith.constant 0 : index
    %131 = vector.load %arg1[%c5, %c0_51, %c0_52] : memref<8x8x512xf32, #tpu.memory_space<vmem>>, vector<1x8x512xf32>
    %132 = vector.shape_cast %131 : vector<1x8x512xf32> to vector<8x512xf32>
    %cst_53 = arith.constant dense<0.000000e+00> : vector<8x512xf32>
    %133 = tpu.matmul %127, %3, %cst_53 {dimension_numbers = #tpu.dot_dimension_numbers<[1], [0], [0], [1], [0, 0, 1, 1], [], []>} : vector<8x128xf32>, vector<128x512xf32>, vector<8x512xf32> -> vector<8x512xf32>
    %134 = arith.addf %132, %133 : vector<8x512xf32>
    %135 = vector.extract_strided_slice %134 {offsets = [0, 0], sizes = [8, 384], strides = [1, 1]} : vector<8x512xf32> to vector<8x384xf32>
    %cst_54 = arith.constant 5.000000e-01 : f32
    %136 = vector.broadcast %cst_54 : f32 to vector<8x384xf32>
    %137 = arith.mulf %136, %135 : vector<8x384xf32>
    %138 = math.tanh %137 : vector<8x384xf32>
    %cst_55 = arith.constant 5.000000e-01 : f32
    %139 = vector.broadcast %cst_55 : f32 to vector<8x384xf32>
    %140 = arith.mulf %139, %138 : vector<8x384xf32>
    %cst_56 = arith.constant 5.000000e-01 : f32
    %141 = vector.broadcast %cst_56 : f32 to vector<8x384xf32>
    %142 = arith.addf %140, %141 : vector<8x384xf32>
    %143 = vector.extract_strided_slice %134 {offsets = [0, 384], sizes = [8, 128], strides = [1, 1]} : vector<8x512xf32> to vector<8x128xf32>
    %144 = math.tanh %143 : vector<8x128xf32>
    %145 = vector.extract_strided_slice %142 {offsets = [0, 0], sizes = [8, 128], strides = [1, 1]} : vector<8x384xf32> to vector<8x128xf32>
    %146 = vector.extract_strided_slice %142 {offsets = [0, 128], sizes = [8, 128], strides = [1, 1]} : vector<8x384xf32> to vector<8x128xf32>
    %147 = vector.extract_strided_slice %142 {offsets = [0, 256], sizes = [8, 128], strides = [1, 1]} : vector<8x384xf32> to vector<8x128xf32>
    %148 = arith.mulf %146, %125 : vector<8x128xf32>
    %149 = arith.mulf %145, %144 : vector<8x128xf32>
    %150 = arith.addf %148, %149 : vector<8x128xf32>
    %151 = math.tanh %150 : vector<8x128xf32>
    %152 = arith.mulf %147, %151 : vector<8x128xf32>
    %c5_57 = arith.constant 5 : index
    %c0_58 = arith.constant 0 : index
    %c0_59 = arith.constant 0 : index
    %153 = vector.load %arg3[%c5_57, %c0_58, %c0_59] : memref<8x8x128xf32, #tpu.memory_space<vmem>>, vector<1x8x128xf32>
    %154 = vector.shape_cast %153 : vector<1x8x128xf32> to vector<8x128xf32>
    %155 = vector.shape_cast %152 : vector<8x128xf32> to vector<1x8x128xf32>
    tpu.vector_store %arg3[%c5_57, %c0_58, %c0_59], %155 {strides = array<i32>} : memref<8x8x128xf32, #tpu.memory_space<vmem>>, vector<1x8x128xf32>,
    %c6 = arith.constant 6 : index
    %c0_60 = arith.constant 0 : index
    %c0_61 = arith.constant 0 : index
    %156 = vector.load %arg1[%c6, %c0_60, %c0_61] : memref<8x8x512xf32, #tpu.memory_space<vmem>>, vector<1x8x512xf32>
    %157 = vector.shape_cast %156 : vector<1x8x512xf32> to vector<8x512xf32>
    %cst_62 = arith.constant dense<0.000000e+00> : vector<8x512xf32>
    %158 = tpu.matmul %152, %3, %cst_62 {dimension_numbers = #tpu.dot_dimension_numbers<[1], [0], [0], [1], [0, 0, 1, 1], [], []>} : vector<8x128xf32>, vector<128x512xf32>, vector<8x512xf32> -> vector<8x512xf32>
    %159 = arith.addf %157, %158 : vector<8x512xf32>
    %160 = vector.extract_strided_slice %159 {offsets = [0, 0], sizes = [8, 384], strides = [1, 1]} : vector<8x512xf32> to vector<8x384xf32>
    %cst_63 = arith.constant 5.000000e-01 : f32
    %161 = vector.broadcast %cst_63 : f32 to vector<8x384xf32>
    %162 = arith.mulf %161, %160 : vector<8x384xf32>
    %163 = math.tanh %162 : vector<8x384xf32>
    %cst_64 = arith.constant 5.000000e-01 : f32
    %164 = vector.broadcast %cst_64 : f32 to vector<8x384xf32>
    %165 = arith.mulf %164, %163 : vector<8x384xf32>
    %cst_65 = arith.constant 5.000000e-01 : f32
    %166 = vector.broadcast %cst_65 : f32 to vector<8x384xf32>
    %167 = arith.addf %165, %166 : vector<8x384xf32>
    %168 = vector.extract_strided_slice %159 {offsets = [0, 384], sizes = [8, 128], strides = [1, 1]} : vector<8x512xf32> to vector<8x128xf32>
    %169 = math.tanh %168 : vector<8x128xf32>
    %170 = vector.extract_strided_slice %167 {offsets = [0, 0], sizes = [8, 128], strides = [1, 1]} : vector<8x384xf32> to vector<8x128xf32>
    %171 = vector.extract_strided_slice %167 {offsets = [0, 128], sizes = [8, 128], strides = [1, 1]} : vector<8x384xf32> to vector<8x128xf32>
    %172 = vector.extract_strided_slice %167 {offsets = [0, 256], sizes = [8, 128], strides = [1, 1]} : vector<8x384xf32> to vector<8x128xf32>
    %173 = arith.mulf %171, %150 : vector<8x128xf32>
    %174 = arith.mulf %170, %169 : vector<8x128xf32>
    %175 = arith.addf %173, %174 : vector<8x128xf32>
    %176 = math.tanh %175 : vector<8x128xf32>
    %177 = arith.mulf %172, %176 : vector<8x128xf32>
    %c6_66 = arith.constant 6 : index
    %c0_67 = arith.constant 0 : index
    %c0_68 = arith.constant 0 : index
    %178 = vector.load %arg3[%c6_66, %c0_67, %c0_68] : memref<8x8x128xf32, #tpu.memory_space<vmem>>, vector<1x8x128xf32>
    %179 = vector.shape_cast %178 : vector<1x8x128xf32> to vector<8x128xf32>
    %180 = vector.shape_cast %177 : vector<8x128xf32> to vector<1x8x128xf32>
    tpu.vector_store %arg3[%c6_66, %c0_67, %c0_68], %180 {strides = array<i32>} : memref<8x8x128xf32, #tpu.memory_space<vmem>>, vector<1x8x128xf32>,
    %c7 = arith.constant 7 : index
    %c0_69 = arith.constant 0 : index
    %c0_70 = arith.constant 0 : index
    %181 = vector.load %arg1[%c7, %c0_69, %c0_70] : memref<8x8x512xf32, #tpu.memory_space<vmem>>, vector<1x8x512xf32>
    %182 = vector.shape_cast %181 : vector<1x8x512xf32> to vector<8x512xf32>
    %cst_71 = arith.constant dense<0.000000e+00> : vector<8x512xf32>
    %183 = tpu.matmul %177, %3, %cst_71 {dimension_numbers = #tpu.dot_dimension_numbers<[1], [0], [0], [1], [0, 0, 1, 1], [], []>} : vector<8x128xf32>, vector<128x512xf32>, vector<8x512xf32> -> vector<8x512xf32>
    %184 = arith.addf %182, %183 : vector<8x512xf32>
    %185 = vector.extract_strided_slice %184 {offsets = [0, 0], sizes = [8, 384], strides = [1, 1]} : vector<8x512xf32> to vector<8x384xf32>
    %cst_72 = arith.constant 5.000000e-01 : f32
    %186 = vector.broadcast %cst_72 : f32 to vector<8x384xf32>
    %187 = arith.mulf %186, %185 : vector<8x384xf32>
    %188 = math.tanh %187 : vector<8x384xf32>
    %cst_73 = arith.constant 5.000000e-01 : f32
    %189 = vector.broadcast %cst_73 : f32 to vector<8x384xf32>
    %190 = arith.mulf %189, %188 : vector<8x384xf32>
    %cst_74 = arith.constant 5.000000e-01 : f32
    %191 = vector.broadcast %cst_74 : f32 to vector<8x384xf32>
    %192 = arith.addf %190, %191 : vector<8x384xf32>
    %193 = vector.extract_strided_slice %184 {offsets = [0, 384], sizes = [8, 128], strides = [1, 1]} : vector<8x512xf32> to vector<8x128xf32>
    %194 = math.tanh %193 : vector<8x128xf32>
    %195 = vector.extract_strided_slice %192 {offsets = [0, 0], sizes = [8, 128], strides = [1, 1]} : vector<8x384xf32> to vector<8x128xf32>
    %196 = vector.extract_strided_slice %192 {offsets = [0, 128], sizes = [8, 128], strides = [1, 1]} : vector<8x384xf32> to vector<8x128xf32>
    %197 = vector.extract_strided_slice %192 {offsets = [0, 256], sizes = [8, 128], strides = [1, 1]} : vector<8x384xf32> to vector<8x128xf32>
    %198 = arith.mulf %196, %175 : vector<8x128xf32>
    %199 = arith.mulf %195, %194 : vector<8x128xf32>
    %200 = arith.addf %198, %199 : vector<8x128xf32>
    %201 = math.tanh %200 : vector<8x128xf32>
    %202 = arith.mulf %197, %201 : vector<8x128xf32>
    %c7_75 = arith.constant 7 : index
    %c0_76 = arith.constant 0 : index
    %c0_77 = arith.constant 0 : index
    %203 = vector.load %arg3[%c7_75, %c0_76, %c0_77] : memref<8x8x128xf32, #tpu.memory_space<vmem>>, vector<1x8x128xf32>
    %204 = vector.shape_cast %203 : vector<1x8x128xf32> to vector<8x128xf32>
    %205 = vector.shape_cast %202 : vector<8x128xf32> to vector<1x8x128xf32>
    tpu.vector_store %arg3[%c7_75, %c0_76, %c0_77], %205 {strides = array<i32>} : memref<8x8x128xf32, #tpu.memory_space<vmem>>, vector<1x8x128xf32>,
    %c0_78 = arith.constant 0 : index
    %c0_79 = arith.constant 0 : index
    %206 = vector.load %arg4[%c0_78, %c0_79] : memref<8x128xf32, #tpu.memory_space<vmem>>, vector<8x128xf32>
    tpu.vector_store %arg4[%c0_78, %c0_79], %202 {strides = array<i32>} : memref<8x128xf32, #tpu.memory_space<vmem>>, vector<8x128xf32>,
    %c0_80 = arith.constant 0 : index
    %c0_81 = arith.constant 0 : index
    %207 = vector.load %arg5[%c0_80, %c0_81] : memref<8x128xf32, #tpu.memory_space<vmem>>, vector<8x128xf32>
    tpu.vector_store %arg5[%c0_80, %c0_81], %200 {strides = array<i32>} : memref<8x128xf32, #tpu.memory_space<vmem>>, vector<8x128xf32>,
    return
  }
  func.func @transform_0(%arg0: i32) -> (i32, i32, i32) {
    %c0_i32 = arith.constant 0 : i32
    %c0_i32_0 = arith.constant 0 : i32
    %c0_i32_1 = arith.constant 0 : i32
    return %arg0, %c0_i32, %c0_i32_0 : i32, i32, i32
  }
  func.func @transform_1(%arg0: i32) -> (i32, i32) {
    %c0_i32 = arith.constant 0 : i32
    %c0_i32_0 = arith.constant 0 : i32
    %c0_i32_1 = arith.constant 0 : i32
    return %c0_i32, %c0_i32_0 : i32, i32
  }
  func.func @transform_2(%arg0: i32) -> (i32, i32, i32) {
    %c0_i32 = arith.constant 0 : i32
    %c0_i32_0 = arith.constant 0 : i32
    %c0_i32_1 = arith.constant 0 : i32
    return %arg0, %c0_i32, %c0_i32_0 : i32, i32, i32
  }
}

</mosaic_0001>

<llo_original>
// kernel: tpu_custom_call.1
$region0: #{tpu_custom_call.1}
  #allocation0 [shape = 'u32[]', space=smem, size = 0x4, offset = 0x4, fixed_abs, tag = 'smem constant byte address 0x4 - core index']
  #allocation1 [shape = 'u32[144,128]{1,0:T(1,128)}', space=vmem, size = 0x12000, scoped, tag = 'internal scratch']
  #allocation2 [shape = 'f32[8,128]{1,0:T(8,128)}', space=vmem, size = 0x1000, scoped, tag = 'scratch operand']
  #allocation3 [shape = 'f32[8,128]{1,0:T(8,128)}', space=vmem, size = 0x1000, scoped, tag = 'scratch operand']
  %s0 = inlined_call_operand.hbm [shape: f32[8,8,512], index: 0, kind: input, shape index: {}]
  %s1 = inlined_call_operand.hbm [shape: f32[128,512], index: 1, kind: input, shape index: {}]
  %s2 = inlined_call_operand.hbm [shape: f32[8,8,128], index: 2, kind: output, shape index: {}]
  %s3 = sld [smem:[#allocation0]]
  $region30: #{tpu_custom_call.1} parent=0
    _
  %s5 = ssub.s32 1, %s3
  %s6 = scalar_select 0, %s5, %s3
  $region1: #{tpu_custom_call.1} parent=0
    #allocation4 [shape = 'u8[131072]{0}', space=vmem, size = 0x20000, scoped, tag = 'input window, operand 0, single buffered']
    #allocation5 [shape = 's32[1]{0}', space=sflag, size = 0x4, scoped, tag = 'scoped memory for tpu_custom_call.1']
    #allocation6 [shape = 's32[1]{0}', space=sflag, size = 0x4, scoped, tag = 'scoped memory for tpu_custom_call.1']
    #allocation7 [shape = 'u8[262144]{0}', space=vmem, size = 0x40000, scoped, tag = 'input window, operand 1, single buffered']
    #allocation8 [shape = 's32[1]{0}', space=sflag, size = 0x4, scoped, tag = 'scoped memory for tpu_custom_call.1']
    #allocation9 [shape = 'u8[32768]{0}', space=vmem, size = 0x8000, scoped, tag = 'output window, operand 0, single buffered']
    %7 = vsyncpa [#allocation5], 0
    %8 = vsyncpa [#allocation8], 0
    %9 = vsyncpa [#allocation6], 0
    // Predicated region
    $region2: #{tpu_custom_call.1} parent=1 // pred_check
      _
    $region3: #{tpu_custom_call.1} parent=1 // pred_check_branch
      %11 = sbr.rel (0) target = $region5
    $region4: #{tpu_custom_call.1} parent=1 // pred_region
      %s13 = ssub.s32 4096, 4096
      %14 = vsyncadd [#allocation5], %s13
      %s15 = sshll.u32 [#allocation4], 4
      %s16 = int_to_ptr.vmem [resolvable:$true] %s15
      %21 = dma.hbm_to_vmem [thread:$0]  %s0, 4096, %s16, [#allocation5], 512, 512, 32
    $region5: #{tpu_custom_call.1} parent=1 // pred_fallthru
      _
    // Predicated region
    $region6: #{tpu_custom_call.1} parent=1 // pred_check
      _
    $region7: #{tpu_custom_call.1} parent=1 // pred_check_branch
      %23 = sbr.rel (0) target = $region9
    $region8: #{tpu_custom_call.1} parent=1 // pred_region
      %s25 = ssub.s32 8192, 8192
      %26 = vsyncadd [#allocation8], %s25
      %s27 = sshll.u32 [#allocation7], 4
      %s28 = int_to_ptr.vmem [resolvable:$true] %s27
      %33 = dma.hbm_to_vmem [thread:$0]  %s1, 8192, %s28, [#allocation8], 512, 512, 32
    $region9: #{tpu_custom_call.1} parent=1 // pred_fallthru
      _
    // Predicated region
    $region10: #{tpu_custom_call.1} parent=1 // pred_check
      _
    $region11: #{tpu_custom_call.1} parent=1 // pred_check_branch
      %35 = sbr.rel (0) target = $region13
    $region12: #{tpu_custom_call.1} parent=1 // pred_region
      %36 = dma.done [#allocation5], 4096
    $region13: #{tpu_custom_call.1} parent=1 // pred_fallthru
      _
    // Predicated region
    $region14: #{tpu_custom_call.1} parent=1 // pred_check
      _
    $region15: #{tpu_custom_call.1} parent=1 // pred_check_branch
      %38 = sbr.rel (0) target = $region17
    $region16: #{tpu_custom_call.1} parent=1 // pred_region
      %39 = dma.done [#allocation8], 8192
    $region17: #{tpu_custom_call.1} parent=1 // pred_fallthru
      _
    %p40 = scmp.eq.s32.totalorder 0, 0
    // Predicated region
    $region18: #{tpu_custom_call.1} parent=1 // pred_check
      %p41 = pneg %p40
    $region19: #{tpu_custom_call.1} parent=1 // pred_check_branch
      %43 = sbr.rel (%p41) target = $region21
    $region20: #{tpu_custom_call.1} parent=1 // pred_region
      %44 = vst [vmem:[#allocation2] sm:$0xff] 0.0
      %45 = vst [vmem:[#allocation3] sm:$0xff] 0.0
    $region21: #{tpu_custom_call.1} parent=1 // pred_fallthru
      _
    %v46 = vld [vmem:[#allocation7] sm:$0xff]
    %v47 = vld [vmem:[#allocation7 + $0x8] sm:$0xff]
    %v48 = vld [vmem:[#allocation7 + $0x10] sm:$0xff]
    %v49 = vld [vmem:[#allocation7 + $0x18] sm:$0xff]
    %v50 = vld [vmem:[#allocation7 + $0x20] sm:$0xff]
    %v51 = vld [vmem:[#allocation7 + $0x28] sm:$0xff]
    %v52 = vld [vmem:[#allocation7 + $0x30] sm:$0xff]
    %v53 = vld [vmem:[#allocation7 + $0x38] sm:$0xff]
    %v54 = vld [vmem:[#allocation7 + $0x40] sm:$0xff]
    %v55 = vld [vmem:[#allocation7 + $0x48] sm:$0xff]
    %v56 = vld [vmem:[#allocation7 + $0x50] sm:$0xff]
    %v57 = vld [vmem:[#allocation7 + $0x58] sm:$0xff]
    %v58 = vld [vmem:[#allocation7 + $0x60] sm:$0xff]
    %v59 = vld [vmem:[#allocation7 + $0x68] sm:$0xff]
    %v60 = vld [vmem:[#allocation7 + $0x70] sm:$0xff]
    %v61 = vld [vmem:[#allocation7 + $0x78] sm:$0xff]
    %v62 = vld [vmem:[#allocation7 + $0x80] sm:$0xff]
    %v63 = vld [vmem:[#allocation7 + $0x88] sm:$0xff]
    %v64 = vld [vmem:[#allocation7 + $0x90] sm:$0xff]
    %v65 = vld [vmem:[#allocation7 + $0x98] sm:$0xff]
    %v66 = vld [vmem:[#allocation7 + $0xa0] sm:$0xff]
    %v67 = vld [vmem:[#allocation7 + $0xa8] sm:$0xff]
    %v68 = vld [vmem:[#allocation7 + $0xb0] sm:$0xff]
    %v69 = vld [vmem:[#allocation7 + $0xb8] sm:$0xff]
    %v70 = vld [vmem:[#allocation7 + $0xc0] sm:$0xff]
    %v71 = vld [vmem:[#allocation7 + $0xc8] sm:$0xff]
    %v72 = vld [vmem:[#allocation7 + $0xd0] sm:$0xff]
    %v73 = vld [vmem:[#allocation7 + $0xd8] sm:$0xff]
    %v74 = vld [vmem:[#allocation7 + $0xe0] sm:$0xff]
    %v75 = vld [vmem:[#allocation7 + $0xe8] sm:$0xff]
    %v76 = vld [vmem:[#allocation7 + $0xf0] sm:$0xff]
    %v77 = vld [vmem:[#allocation7 + $0xf8] sm:$0xff]
    %v78 = vld [vmem:[#allocation7 + $0x100] sm:$0xff]
    %v79 = vld [vmem:[#allocation7 + $0x108] sm:$0xff]
    %v80 = vld [vmem:[#allocation7 + $0x110] sm:$0xff]
    %v81 = vld [vmem:[#allocation7 + $0x118] sm:$0xff]
    %v82 = vld [vmem:[#allocation7 + $0x120] sm:$0xff]
    %v83 = vld [vmem:[#allocation7 + $0x128] sm:$0xff]
    %v84 = vld [vmem:[#allocation7 + $0x130] sm:$0xff]
    %v85 = vld [vmem:[#allocation7 + $0x138] sm:$0xff]
    %v86 = vld [vmem:[#allocation7 + $0x140] sm:$0xff]
    %v87 = vld [vmem:[#allocation7 + $0x148] sm:$0xff]
    %v88 = vld [vmem:[#allocation7 + $0x150] sm:$0xff]
    %v89 = vld [vmem:[#allocation7 + $0x158] sm:$0xff]
    %v90 = vld [vmem:[#allocation7 + $0x160] sm:$0xff]
    %v91 = vld [vmem:[#allocation7 + $0x168] sm:$0xff]
    %v92 = vld [vmem:[#allocation7 + $0x170] sm:$0xff]
    %v93 = vld [vmem:[#allocation7 + $0x178] sm:$0xff]
    %v94 = vld [vmem:[#allocation7 + $0x180] sm:$0xff]
    %v95 = vld [vmem:[#allocation7 + $0x188] sm:$0xff]
    %v96 = vld [vmem:[#allocation7 + $0x190] sm:$0xff]
    %v97 = vld [vmem:[#allocation7 + $0x198] sm:$0xff]
    %v98 = vld [vmem:[#allocation7 + $0x1a0] sm:$0xff]
    %v99 = vld [vmem:[#allocation7 + $0x1a8] sm:$0xff]
    %v100 = vld [vmem:[#allocation7 + $0x1b0] sm:$0xff]
    %v101 = vld [vmem:[#allocation7 + $0x1b8] sm:$0xff]
    %v102 = vld [vmem:[#allocation7 + $0x1c0] sm:$0xff]
    %v103 = vld [vmem:[#allocation7 + $0x1c8] sm:$0xff]
    %v104 = vld [vmem:[#allocation7 + $0x1d0] sm:$0xff]
    %v105 = vld [vmem:[#allocation7 + $0x1d8] sm:$0xff]
    %v106 = vld [vmem:[#allocation7 + $0x1e0] sm:$0xff]
    %v107 = vld [vmem:[#allocation7 + $0x1e8] sm:$0xff]
    %v108 = vld [vmem:[#allocation7 + $0x1f0] sm:$0xff]
    %v109 = vld [vmem:[#allocation7 + $0x1f8] sm:$0xff]
    %v110 = vld [vmem:[#allocation2] sm:$0xff]
    %v111 = vld [vmem:[#allocation3] sm:$0xff]
    %v112 = vld [vmem:[#allocation4] sm:$0xff]
    %v113 = vld [vmem:[#allocation4 + $0x8] sm:$0xff]
    %v114 = vld [vmem:[#allocation4 + $0x10] sm:$0xff]
    %v115 = vld [vmem:[#allocation4 + $0x18] sm:$0xff]
    %116 = vmatprep.subr.mxu0 %v107
    %117 = vmatpush1.msra.mxu0 %v106
    %118 = vmatprep.subr.mxu0 %v103
    %119 = vmatpush1.msra.mxu0 %v102
    %120 = vmatprep.subr.mxu0 %v99
    %121 = vmatpush1.msra.mxu0 %v98
    %122 = vmatprep.subr.mxu0 %v95
    %123 = vmatpush1.msra.mxu0 %v94
    %124 = vmatprep.subr.mxu0 %v91
    %125 = vmatpush1.msra.mxu0 %v90
    %126 = vmatprep.subr.mxu0 %v87
    %127 = vmatpush1.msra.mxu0 %v86
    %128 = vmatprep.subr.mxu0 %v83
    %129 = vmatpush1.msra.mxu0 %v82
    %130 = vmatprep.subr.mxu0 %v79
    %131 = vmatpush1.msra.mxu0 %v78
    %132 = vmatprep.subr.mxu0 %v75
    %133 = vmatpush1.msra.mxu0 %v74
    %134 = vmatprep.subr.mxu0 %v71
    %135 = vmatpush1.msra.mxu0 %v70
    %136 = vmatprep.subr.mxu0 %v67
    %137 = vmatpush1.msra.mxu0 %v66
    %138 = vmatprep.subr.mxu0 %v63
    %139 = vmatpush1.msra.mxu0 %v62
    %140 = vmatprep.subr.mxu0 %v59
    %141 = vmatpush1.msra.mxu0 %v58
    %142 = vmatprep.subr.mxu0 %v55
    %143 = vmatpush1.msra.mxu0 %v54
    %144 = vmatprep.subr.mxu0 %v51
    %145 = vmatpush1.msra.mxu0 %v50
    %146 = vmatprep.subr.mxu0 %v47
    %147 = vmatpush1.msra.mxu0 %v46
    %148 = vmatprep.subr.mxu0 0.0
    %149 = vmatpush2.msra.mxu0 0.0
    %150 = vmatprep.subr.mxu0 0.0
    %151 = vmatpush2.msra.mxu0 0.0
    %152 = vmatprep.subr.mxu0 0.0
    %153 = vmatpush2.msra.mxu0 0.0
    %154 = vmatprep.subr.mxu0 0.0
    %155 = vmatpush2.msra.mxu0 0.0
    %156 = vmatprep.subr.mxu0 0.0
    %157 = vmatpush2.msra.mxu0 0.0
    %158 = vmatprep.subr.mxu0 0.0
    %159 = vmatpush2.msra.mxu0 0.0
    %160 = vmatprep.subr.mxu0 0.0
    %161 = vmatpush2.msra.mxu0 0.0
    %162 = vmatprep.subr.mxu0 0.0
    %163 = vmatpush2.msra.mxu0 0.0
    %164 = vmatprep.subr.mxu0 0.0
    %165 = vmatpush2.msra.mxu0 0.0
    %166 = vmatprep.subr.mxu0 0.0
    %167 = vmatpush2.msra.mxu0 0.0
    %168 = vmatprep.subr.mxu0 0.0
    %169 = vmatpush2.msra.mxu0 0.0
    %170 = vmatprep.subr.mxu0 0.0
    %171 = vmatpush2.msra.mxu0 0.0
    %172 = vmatprep.subr.mxu0 0.0
    %173 = vmatpush2.msra.mxu0 0.0
    %174 = vmatprep.subr.mxu0 0.0
    %175 = vmatpush2.msra.mxu0 0.0
    %176 = vmatprep.subr.mxu0 0.0
    %177 = vmatpush2.msra.mxu0 0.0
    %178 = vmatprep.subr.mxu0 0.0
    %179 = vmatpush2.msra.mxu0 0.0
    %180 = vmatprep.mubr.f32.mxu0 0.0
    %181 = vmatmul.mubr.f32.gmra.mxu0 %v110
    %v182 = vpop.f32.mrf.mxu0
    %v183 = vadd.f32 0.0, %v182
    %v184 = vpop.f32.mrf.mxu0
    %v185 = vadd.f32 0.0, %v184
    %186 = vdwg.mxu0
    %187 = vmatprep.subr.mxu0 %v109
    %188 = vmatpush1.msra.mxu0 %v108
    %189 = vmatprep.subr.mxu0 %v105
    %190 = vmatpush1.msra.mxu0 %v104
    %191 = vmatprep.subr.mxu0 %v101
    %192 = vmatpush1.msra.mxu0 %v100
    %193 = vmatprep.subr.mxu0 %v97
    %194 = vmatpush1.msra.mxu0 %v96
    %195 = vmatprep.subr.mxu0 %v93
    %196 = vmatpush1.msra.mxu0 %v92
    %197 = vmatprep.subr.mxu0 %v89
    %198 = vmatpush1.msra.mxu0 %v88
    %199 = vmatprep.subr.mxu0 %v85
    %200 = vmatpush1.msra.mxu0 %v84
    %201 = vmatprep.subr.mxu0 %v81
    %202 = vmatpush1.msra.mxu0 %v80
    %203 = vmatprep.subr.mxu0 %v77
    %204 = vmatpush1.msra.mxu0 %v76
    %205 = vmatprep.subr.mxu0 %v73
    %206 = vmatpush1.msra.mxu0 %v72
    %207 = vmatprep.subr.mxu0 %v69
    %208 = vmatpush1.msra.mxu0 %v68
    %209 = vmatprep.subr.mxu0 %v65
    %210 = vmatpush1.msra.mxu0 %v64
    %211 = vmatprep.subr.mxu0 %v61
    %212 = vmatpush1.msra.mxu0 %v60
    %213 = vmatprep.subr.mxu0 %v57
    %214 = vmatpush1.msra.mxu0 %v56
    %215 = vmatprep.subr.mxu0 %v53
    %216 = vmatpush1.msra.mxu0 %v52
    %217 = vmatprep.subr.mxu0 %v49
    %218 = vmatpush1.msra.mxu0 %v48
    %219 = vmatprep.subr.mxu0 0.0
    %220 = vmatpush2.msra.mxu0 0.0
    %221 = vmatprep.subr.mxu0 0.0
    %222 = vmatpush2.msra.mxu0 0.0
    %223 = vmatprep.subr.mxu0 0.0
    %224 = vmatpush2.msra.mxu0 0.0
    %225 = vmatprep.subr.mxu0 0.0
    %226 = vmatpush2.msra.mxu0 0.0
    %227 = vmatprep.subr.mxu0 0.0
    %228 = vmatpush2.msra.mxu0 0.0
    %229 = vmatprep.subr.mxu0 0.0
    %230 = vmatpush2.msra.mxu0 0.0
    %231 = vmatprep.subr.mxu0 0.0
    %232 = vmatpush2.msra.mxu0 0.0
    %233 = vmatprep.subr.mxu0 0.0
    %234 = vmatpush2.msra.mxu0 0.0
    %235 = vmatprep.subr.mxu0 0.0
    %236 = vmatpush2.msra.mxu0 0.0
    %237 = vmatprep.subr.mxu0 0.0
    %238 = vmatpush2.msra.mxu0 0.0
    %239 = vmatprep.subr.mxu0 0.0
    %240 = vmatpush2.msra.mxu0 0.0
    %241 = vmatprep.subr.mxu0 0.0
    %242 = vmatpush2.msra.mxu0 0.0
    %243 = vmatprep.subr.mxu0 0.0
    %244 = vmatpush2.msra.mxu0 0.0
    %245 = vmatprep.subr.mxu0 0.0
    %246 = vmatpush2.msra.mxu0 0.0
    %247 = vmatprep.subr.mxu0 0.0
    %248 = vmatpush2.msra.mxu0 0.0
    %249 = vmatprep.subr.mxu0 0.0
    %250 = vmatpush2.msra.mxu0 0.0
    %251 = vmatprep.mubr.f32.mxu0 0.0
    %252 = vmatmul.mubr.f32.gmra.mxu0 %v110
    %v253 = vpop.f32.mrf.mxu0
    %v254 = vadd.f32 0.0, %v253
    %v255 = vpop.f32.mrf.mxu0
    %v256 = vadd.f32 0.0, %v255
    %257 = vdwg.mxu0
    %v258 = vadd.f32 %v112, %v183
    %v259 = vadd.f32 %v113, %v185
    %v260 = vadd.f32 %v114, %v254
    %v261 = vadd.f32 %v115, %v256
    %v262 = vmul.f32 %v258, 0.5
    %v263 = vmul.f32 %v259, 0.5
    %v264 = vmul.f32 %v260, 0.5
    %v265 = vtanh.pop %v262
    %v266 = vtanh.pop %v263
    %v267 = vtanh.pop %v264
    %v268 = vmul.f32 %v265, 0.5
    %v269 = vmul.f32 %v266, 0.5
    %v270 = vmul.f32 %v267, 0.5
    %v271 = vadd.f32 %v268, 0.5
    %v272 = vadd.f32 %v269, 0.5
    %v273 = vadd.f32 %v270, 0.5
    %v274 = vtanh.pop %v261
    %v275 = vmul.f32 %v272, %v111
    %v276 = vmul.f32 %v271, %v274
    %v277 = vadd.f32 %v275, %v276
    %v278 = vtanh.pop %v277
    %v279 = vmul.f32 %v273, %v278
    %280 = vst [vmem:[#allocation9] sm:$0xff] %v279
    %s281 = scalar_lea.vmem [#allocation4], 32
    %v282 = vld [vmem:[%s281] sm:$0xff]
    %v283 = vld [vmem:[%s281 + $0x8] sm:$0xff]
    %v284 = vld [vmem:[%s281 + $0x10] sm:$0xff]
    %v285 = vld [vmem:[%s281 + $0x18] sm:$0xff]
    %286 = vmatprep.subr.mxu0 %v107
    %287 = vmatpush1.msra.mxu0 %v106
    %288 = vmatprep.subr.mxu0 %v103
    %289 = vmatpush1.msra.mxu0 %v102
    %290 = vmatprep.subr.mxu0 %v99
    %291 = vmatpush1.msra.mxu0 %v98
    %292 = vmatprep.subr.mxu0 %v95
    %293 = vmatpush1.msra.mxu0 %v94
    %294 = vmatprep.subr.mxu0 %v91
    %295 = vmatpush1.msra.mxu0 %v90
    %296 = vmatprep.subr.mxu0 %v87
    %297 = vmatpush1.msra.mxu0 %v86
    %298 = vmatprep.subr.mxu0 %v83
    %299 = vmatpush1.msra.mxu0 %v82
    %300 = vmatprep.subr.mxu0 %v79
    %301 = vmatpush1.msra.mxu0 %v78
    %302 = vmatprep.subr.mxu0 %v75
    %303 = vmatpush1.msra.mxu0 %v74
    %304 = vmatprep.subr.mxu0 %v71
    %305 = vmatpush1.msra.mxu0 %v70
    %306 = vmatprep.subr.mxu0 %v67
    %307 = vmatpush1.msra.mxu0 %v66
    %308 = vmatprep.subr.mxu0 %v63
    %309 = vmatpush1.msra.mxu0 %v62
    %310 = vmatprep.subr.mxu0 %v59
    %311 = vmatpush1.msra.mxu0 %v58
    %312 = vmatprep.subr.mxu0 %v55
    %313 = vmatpush1.msra.mxu0 %v54
    %314 = vmatprep.subr.mxu0 %v51
    %315 = vmatpush1.msra.mxu0 %v50
    %316 = vmatprep.subr.mxu0 %v47
    %317 = vmatpush1.msra.mxu0 %v46
    %318 = vmatprep.subr.mxu0 0.0
    %319 = vmatpush2.msra.mxu0 0.0
    %320 = vmatprep.subr.mxu0 0.0
    %321 = vmatpush2.msra.mxu0 0.0
    %322 = vmatprep.subr.mxu0 0.0
    %323 = vmatpush2.msra.mxu0 0.0
    %324 = vmatprep.subr.mxu0 0.0
    %325 = vmatpush2.msra.mxu0 0.0
    %326 = vmatprep.subr.mxu0 0.0
    %327 = vmatpush2.msra.mxu0 0.0
    %328 = vmatprep.subr.mxu0 0.0
    %329 = vmatpush2.msra.mxu0 0.0
    %330 = vmatprep.subr.mxu0 0.0
    %331 = vmatpush2.msra.mxu0 0.0
    %332 = vmatprep.subr.mxu0 0.0
    %333 = vmatpush2.msra.mxu0 0.0
    %334 = vmatprep.subr.mxu0 0.0
    %335 = vmatpush2.msra.mxu0 0.0
    %336 = vmatprep.subr.mxu0 0.0
    %337 = vmatpush2.msra.mxu0 0.0
    %338 = vmatprep.subr.mxu0 0.0
    %339 = vmatpush2.msra.mxu0 0.0
    %340 = vmatprep.subr.mxu0 0.0
    %341 = vmatpush2.msra.mxu0 0.0
    %342 = vmatprep.subr.mxu0 0.0
    %343 = vmatpush2.msra.mxu0 0.0
    %344 = vmatprep.subr.mxu0 0.0
    %345 = vmatpush2.msra.mxu0 0.0
    %346 = vmatprep.subr.mxu0 0.0
    %347 = vmatpush2.msra.mxu0 0.0
    %348 = vmatprep.subr.mxu0 0.0
    %349 = vmatpush2.msra.mxu0 0.0
    %350 = vmatprep.mubr.f32.mxu0 0.0
    %351 = vmatmul.mubr.f32.gmra.mxu0 %v279
    %v352 = vpop.f32.mrf.mxu0
    %v353 = vadd.f32 0.0, %v352
    %v354 = vpop.f32.mrf.mxu0
    %v355 = vadd.f32 0.0, %v354
    %356 = vdwg.mxu0
    %357 = vmatprep.subr.mxu0 %v109
    %358 = vmatpush1.msra.mxu0 %v108
    %359 = vmatprep.subr.mxu0 %v105
    %360 = vmatpush1.msra.mxu0 %v104
    %361 = vmatprep.subr.mxu0 %v101
    %362 = vmatpush1.msra.mxu0 %v100
    %363 = vmatprep.subr.mxu0 %v97
    %364 = vmatpush1.msra.mxu0 %v96
    %365 = vmatprep.subr.mxu0 %v93
    %366 = vmatpush1.msra.mxu0 %v92
    %367 = vmatprep.subr.mxu0 %v89
    %368 = vmatpush1.msra.mxu0 %v88
    %369 = vmatprep.subr.mxu0 %v85
    %370 = vmatpush1.msra.mxu0 %v84
    %371 = vmatprep.subr.mxu0 %v81
    %372 = vmatpush1.msra.mxu0 %v80
    %373 = vmatprep.subr.mxu0 %v77
    %374 = vmatpush1.msra.mxu0 %v76
    %375 = vmatprep.subr.mxu0 %v73
    %376 = vmatpush1.msra.mxu0 %v72
    %377 = vmatprep.subr.mxu0 %v69
    %378 = vmatpush1.msra.mxu0 %v68
    %379 = vmatprep.subr.mxu0 %v65
    %380 = vmatpush1.msra.mxu0 %v64
    %381 = vmatprep.subr.mxu0 %v61
    %382 = vmatpush1.msra.mxu0 %v60
    %383 = vmatprep.subr.mxu0 %v57
    %384 = vmatpush1.msra.mxu0 %v56
    %385 = vmatprep.subr.mxu0 %v53
    %386 = vmatpush1.msra.mxu0 %v52
    %387 = vmatprep.subr.mxu0 %v49
    %388 = vmatpush1.msra.mxu0 %v48
    %389 = vmatprep.subr.mxu0 0.0
    %390 = vmatpush2.msra.mxu0 0.0
    %391 = vmatprep.subr.mxu0 0.0
    %392 = vmatpush2.msra.mxu0 0.0
    %393 = vmatprep.subr.mxu0 0.0
    %394 = vmatpush2.msra.mxu0 0.0
    %395 = vmatprep.subr.mxu0 0.0
    %396 = vmatpush2.msra.mxu0 0.0
    %397 = vmatprep.subr.mxu0 0.0
    %398 = vmatpush2.msra.mxu0 0.0
    %399 = vmatprep.subr.mxu0 0.0
    %400 = vmatpush2.msra.mxu0 0.0
    %401 = vmatprep.subr.mxu0 0.0
    %402 = vmatpush2.msra.mxu0 0.0
    %403 = vmatprep.subr.mxu0 0.0
    %404 = vmatpush2.msra.mxu0 0.0
    %405 = vmatprep.subr.mxu0 0.0
    %406 = vmatpush2.msra.mxu0 0.0
    %407 = vmatprep.subr.mxu0 0.0
    %408 = vmatpush2.msra.mxu0 0.0
    %409 = vmatprep.subr.mxu0 0.0
    %410 = vmatpush2.msra.mxu0 0.0
    %411 = vmatprep.subr.mxu0 0.0
    %412 = vmatpush2.msra.mxu0 0.0
    %413 = vmatprep.subr.mxu0 0.0
    %414 = vmatpush2.msra.mxu0 0.0
    %415 = vmatprep.subr.mxu0 0.0
    %416 = vmatpush2.msra.mxu0 0.0
    %417 = vmatprep.subr.mxu0 0.0
    %418 = vmatpush2.msra.mxu0 0.0
    %419 = vmatprep.subr.mxu0 0.0
    %420 = vmatpush2.msra.mxu0 0.0
    %421 = vmatprep.mubr.f32.mxu0 0.0
    %422 = vmatmul.mubr.f32.gmra.mxu0 %v279
    %v423 = vpop.f32.mrf.mxu0
    %v424 = vadd.f32 0.0, %v423
    %v425 = vpop.f32.mrf.mxu0
    %v426 = vadd.f32 0.0, %v425
    %427 = vdwg.mxu0
    %v428 = vadd.f32 %v282, %v353
    %v429 = vadd.f32 %v283, %v355
    %v430 = vadd.f32 %v284, %v424
    %v431 = vadd.f32 %v285, %v426
    %v432 = vmul.f32 %v428, 0.5
    %v433 = vmul.f32 %v429, 0.5
    %v434 = vmul.f32 %v430, 0.5
    %v435 = vtanh.pop %v432
    %v436 = vtanh.pop %v433
    %v437 = vtanh.pop %v434
    %v438 = vmul.f32 %v435, 0.5
    %v439 = vmul.f32 %v436, 0.5
    %v440 = vmul.f32 %v437, 0.5
    %v441 = vadd.f32 %v438, 0.5
    %v442 = vadd.f32 %v439, 0.5
    %v443 = vadd.f32 %v440, 0.5
    %v444 = vtanh.pop %v431
    %v445 = vmul.f32 %v442, %v277
    %v446 = vmul.f32 %v441, %v444
    %v447 = vadd.f32 %v445, %v446
    %v448 = vtanh.pop %v447
    %v449 = vmul.f32 %v443, %v448
    %s450 = scalar_lea.vmem [#allocation9], 8
    %451 = vst [vmem:[%s450] sm:$0xff] %v449
    %s452 = scalar_lea.vmem [#allocation4], 64
    %v453 = vld [vmem:[%s452] sm:$0xff]
    %v454 = vld [vmem:[%s452 + $0x8] sm:$0xff]
    %v455 = vld [vmem:[%s452 + $0x10] sm:$0xff]
    %v456 = vld [vmem:[%s452 + $0x18] sm:$0xff]
    %457 = vmatprep.subr.mxu0 %v107
    %458 = vmatpush1.msra.mxu0 %v106
    %459 = vmatprep.subr.mxu0 %v103
    %460 = vmatpush1.msra.mxu0 %v102
    %461 = vmatprep.subr.mxu0 %v99
    %462 = vmatpush1.msra.mxu0 %v98
    %463 = vmatprep.subr.mxu0 %v95
    %464 = vmatpush1.msra.mxu0 %v94
    %465 = vmatprep.subr.mxu0 %v91
    %466 = vmatpush1.msra.mxu0 %v90
    %467 = vmatprep.subr.mxu0 %v87
    %468 = vmatpush1.msra.mxu0 %v86
    %469 = vmatprep.subr.mxu0 %v83
    %470 = vmatpush1.msra.mxu0 %v82
    %471 = vmatprep.subr.mxu0 %v79
    %472 = vmatpush1.msra.mxu0 %v78
    %473 = vmatprep.subr.mxu0 %v75
    %474 = vmatpush1.msra.mxu0 %v74
    %475 = vmatprep.subr.mxu0 %v71
    %476 = vmatpush1.msra.mxu0 %v70
    %477 = vmatprep.subr.mxu0 %v67
    %478 = vmatpush1.msra.mxu0 %v66
    %479 = vmatprep.subr.mxu0 %v63
    %480 = vmatpush1.msra.mxu0 %v62
    %481 = vmatprep.subr.mxu0 %v59
    %482 = vmatpush1.msra.mxu0 %v58
    %483 = vmatprep.subr.mxu0 %v55
    %484 = vmatpush1.msra.mxu0 %v54
    %485 = vmatprep.subr.mxu0 %v51
    %486 = vmatpush1.msra.mxu0 %v50
    %487 = vmatprep.subr.mxu0 %v47
    %488 = vmatpush1.msra.mxu0 %v46
    %489 = vmatprep.subr.mxu0 0.0
    %490 = vmatpush2.msra.mxu0 0.0
    %491 = vmatprep.subr.mxu0 0.0
    %492 = vmatpush2.msra.mxu0 0.0
    %493 = vmatprep.subr.mxu0 0.0
    %494 = vmatpush2.msra.mxu0 0.0
    %495 = vmatprep.subr.mxu0 0.0
    %496 = vmatpush2.msra.mxu0 0.0
    %497 = vmatprep.subr.mxu0 0.0
    %498 = vmatpush2.msra.mxu0 0.0
    %499 = vmatprep.subr.mxu0 0.0
    %500 = vmatpush2.msra.mxu0 0.0
    %501 = vmatprep.subr.mxu0 0.0
    %502 = vmatpush2.msra.mxu0 0.0
    %503 = vmatprep.subr.mxu0 0.0
    %504 = vmatpush2.msra.mxu0 0.0
    %505 = vmatprep.subr.mxu0 0.0
    %506 = vmatpush2.msra.mxu0 0.0
    %507 = vmatprep.subr.mxu0 0.0
    %508 = vmatpush2.msra.mxu0 0.0
    %509 = vmatprep.subr.mxu0 0.0
    %510 = vmatpush2.msra.mxu0 0.0
    %511 = vmatprep.subr.mxu0 0.0
    %512 = vmatpush2.msra.mxu0 0.0
    %513 = vmatprep.subr.mxu0 0.0
    %514 = vmatpush2.msra.mxu0 0.0
    %515 = vmatprep.subr.mxu0 0.0
    %516 = vmatpush2.msra.mxu0 0.0
    %517 = vmatprep.subr.mxu0 0.0
    %518 = vmatpush2.msra.mxu0 0.0
    %519 = vmatprep.subr.mxu0 0.0
    %520 = vmatpush2.msra.mxu0 0.0
    %521 = vmatprep.mubr.f32.mxu0 0.0
    %522 = vmatmul.mubr.f32.gmra.mxu0 %v449
    %v523 = vpop.f32.mrf.mxu0
    %v524 = vadd.f32 0.0, %v523
    %v525 = vpop.f32.mrf.mxu0
    %v526 = vadd.f32 0.0, %v525
    %527 = vdwg.mxu0
    %528 = vmatprep.subr.mxu0 %v109
    %529 = vmatpush1.msra.mxu0 %v108
    %530 = vmatprep.subr.mxu0 %v105
    %531 = vmatpush1.msra.mxu0 %v104
    %532 = vmatprep.subr.mxu0 %v101
    %533 = vmatpush1.msra.mxu0 %v100
    %534 = vmatprep.subr.mxu0 %v97
    %535 = vmatpush1.msra.mxu0 %v96
    %536 = vmatprep.subr.mxu0 %v93
    %537 = vmatpush1.msra.mxu0 %v92
    %538 = vmatprep.subr.mxu0 %v89
    %539 = vmatpush1.msra.mxu0 %v88
    %540 = vmatprep.subr.mxu0 %v85
    %541 = vmatpush1.msra.mxu0 %v84
    %542 = vmatprep.subr.mxu0 %v81
    %543 = vmatpush1.msra.mxu0 %v80
    %544 = vmatprep.subr.mxu0 %v77
    %545 = vmatpush1.msra.mxu0 %v76
    %546 = vmatprep.subr.mxu0 %v73
    %547 = vmatpush1.msra.mxu0 %v72
    %548 = vmatprep.subr.mxu0 %v69
    %549 = vmatpush1.msra.mxu0 %v68
    %550 = vmatprep.subr.mxu0 %v65
    %551 = vmatpush1.msra.mxu0 %v64
    %552 = vmatprep.subr.mxu0 %v61
    %553 = vmatpush1.msra.mxu0 %v60
    %554 = vmatprep.subr.mxu0 %v57
    %555 = vmatpush1.msra.mxu0 %v56
    %556 = vmatprep.subr.mxu0 %v53
    %557 = vmatpush1.msra.mxu0 %v52
    %558 = vmatprep.subr.mxu0 %v49
    %559 = vmatpush1.msra.mxu0 %v48
    %560 = vmatprep.subr.mxu0 0.0
    %561 = vmatpush2.msra.mxu0 0.0
    %562 = vmatprep.subr.mxu0 0.0
    %563 = vmatpush2.msra.mxu0 0.0
    %564 = vmatprep.subr.mxu0 0.0
    %565 = vmatpush2.msra.mxu0 0.0
    %566 = vmatprep.subr.mxu0 0.0
    %567 = vmatpush2.msra.mxu0 0.0
    %568 = vmatprep.subr.mxu0 0.0
    %569 = vmatpush2.msra.mxu0 0.0
    %570 = vmatprep.subr.mxu0 0.0
    %571 = vmatpush2.msra.mxu0 0.0
    %572 = vmatprep.subr.mxu0 0.0
    %573 = vmatpush2.msra.mxu0 0.0
    %574 = vmatprep.subr.mxu0 0.0
    %575 = vmatpush2.msra.mxu0 0.0
    %576 = vmatprep.subr.mxu0 0.0
    %577 = vmatpush2.msra.mxu0 0.0
    %578 = vmatprep.subr.mxu0 0.0
    %579 = vmatpush2.msra.mxu0 0.0
    %580 = vmatprep.subr.mxu0 0.0
    %581 = vmatpush2.msra.mxu0 0.0
    %582 = vmatprep.subr.mxu0 0.0
    %583 = vmatpush2.msra.mxu0 0.0
    %584 = vmatprep.subr.mxu0 0.0
    %585 = vmatpush2.msra.mxu0 0.0
    %586 = vmatprep.subr.mxu0 0.0
    %587 = vmatpush2.msra.mxu0 0.0
    %588 = vmatprep.subr.mxu0 0.0
    %589 = vmatpush2.msra.mxu0 0.0
    %590 = vmatprep.subr.mxu0 0.0
    %591 = vmatpush2.msra.mxu0 0.0
    %592 = vmatprep.mubr.f32.mxu0 0.0
    %593 = vmatmul.mubr.f32.gmra.mxu0 %v449
    %v594 = vpop.f32.mrf.mxu0
    %v595 = vadd.f32 0.0, %v594
    %v596 = vpop.f32.mrf.mxu0
    %v597 = vadd.f32 0.0, %v596
    %598 = vdwg.mxu0
    %v599 = vadd.f32 %v453, %v524
    %v600 = vadd.f32 %v454, %v526
    %v601 = vadd.f32 %v455, %v595
    %v602 = vadd.f32 %v456, %v597
    %v603 = vmul.f32 %v599, 0.5
    %v604 = vmul.f32 %v600, 0.5
    %v605 = vmul.f32 %v601, 0.5
    %v606 = vtanh.pop %v603
    %v607 = vtanh.pop %v604
    %v608 = vtanh.pop %v605
    %v609 = vmul.f32 %v606, 0.5
    %v610 = vmul.f32 %v607, 0.5
    %v611 = vmul.f32 %v608, 0.5
    %v612 = vadd.f32 %v609, 0.5
    %v613 = vadd.f32 %v610, 0.5
    %v614 = vadd.f32 %v611, 0.5
    %v615 = vtanh.pop %v602
    %v616 = vmul.f32 %v613, %v447
    %v617 = vmul.f32 %v612, %v615
    %v618 = vadd.f32 %v616, %v617
    %v619 = vtanh.pop %v618
    %v620 = vmul.f32 %v614, %v619
    %s621 = scalar_lea.vmem [#allocation9], 16
    %622 = vst [vmem:[%s621] sm:$0xff] %v620
    %s623 = scalar_lea.vmem [#allocation4], 96
    %v624 = vld [vmem:[%s623] sm:$0xff]
    %v625 = vld [vmem:[%s623 + $0x8] sm:$0xff]
    %v626 = vld [vmem:[%s623 + $0x10] sm:$0xff]
    %v627 = vld [vmem:[%s623 + $0x18] sm:$0xff]
    %628 = vmatprep.subr.mxu0 %v107
    %629 = vmatpush1.msra.mxu0 %v106
    %630 = vmatprep.subr.mxu0 %v103
    %631 = vmatpush1.msra.mxu0 %v102
    %632 = vmatprep.subr.mxu0 %v99
    %633 = vmatpush1.msra.mxu0 %v98
    %634 = vmatprep.subr.mxu0 %v95
    %635 = vmatpush1.msra.mxu0 %v94
    %636 = vmatprep.subr.mxu0 %v91
    %637 = vmatpush1.msra.mxu0 %v90
    %638 = vmatprep.subr.mxu0 %v87
    %639 = vmatpush1.msra.mxu0 %v86
    %640 = vmatprep.subr.mxu0 %v83
    %641 = vmatpush1.msra.mxu0 %v82
    %642 = vmatprep.subr.mxu0 %v79
    %643 = vmatpush1.msra.mxu0 %v78
    %644 = vmatprep.subr.mxu0 %v75
    %645 = vmatpush1.msra.mxu0 %v74
    %646 = vmatprep.subr.mxu0 %v71
    %647 = vmatpush1.msra.mxu0 %v70
    %648 = vmatprep.subr.mxu0 %v67
    %649 = vmatpush1.msra.mxu0 %v66
    %650 = vmatprep.subr.mxu0 %v63
    %651 = vmatpush1.msra.mxu0 %v62
    %652 = vmatprep.subr.mxu0 %v59
    %653 = vmatpush1.msra.mxu0 %v58
    %654 = vmatprep.subr.mxu0 %v55
    %655 = vmatpush1.msra.mxu0 %v54
    %656 = vmatprep.subr.mxu0 %v51
    %657 = vmatpush1.msra.mxu0 %v50
    %658 = vmatprep.subr.mxu0 %v47
    %659 = vmatpush1.msra.mxu0 %v46
    %660 = vmatprep.subr.mxu0 0.0
    %661 = vmatpush2.msra.mxu0 0.0
    %662 = vmatprep.subr.mxu0 0.0
    %663 = vmatpush2.msra.mxu0 0.0
    %664 = vmatprep.subr.mxu0 0.0
    %665 = vmatpush2.msra.mxu0 0.0
    %666 = vmatprep.subr.mxu0 0.0
    %667 = vmatpush2.msra.mxu0 0.0
    %668 = vmatprep.subr.mxu0 0.0
    %669 = vmatpush2.msra.mxu0 0.0
    %670 = vmatprep.subr.mxu0 0.0
    %671 = vmatpush2.msra.mxu0 0.0
    %672 = vmatprep.subr.mxu0 0.0
    %673 = vmatpush2.msra.mxu0 0.0
    %674 = vmatprep.subr.mxu0 0.0
    %675 = vmatpush2.msra.mxu0 0.0
    %676 = vmatprep.subr.mxu0 0.0
    %677 = vmatpush2.msra.mxu0 0.0
    %678 = vmatprep.subr.mxu0 0.0
    %679 = vmatpush2.msra.mxu0 0.0
    %680 = vmatprep.subr.mxu0 0.0
    %681 = vmatpush2.msra.mxu0 0.0
    %682 = vmatprep.subr.mxu0 0.0
    %683 = vmatpush2.msra.mxu0 0.0
    %684 = vmatprep.subr.mxu0 0.0
    %685 = vmatpush2.msra.mxu0 0.0
    %686 = vmatprep.subr.mxu0 0.0
    %687 = vmatpush2.msra.mxu0 0.0
    %688 = vmatprep.subr.mxu0 0.0
    %689 = vmatpush2.msra.mxu0 0.0
    %690 = vmatprep.subr.mxu0 0.0
    %691 = vmatpush2.msra.mxu0 0.0
    %692 = vmatprep.mubr.f32.mxu0 0.0
    %693 = vmatmul.mubr.f32.gmra.mxu0 %v620
    %v694 = vpop.f32.mrf.mxu0
    %v695 = vadd.f32 0.0, %v694
    %v696 = vpop.f32.mrf.mxu0
    %v697 = vadd.f32 0.0, %v696
    %698 = vdwg.mxu0
    %699 = vmatprep.subr.mxu0 %v109
    %700 = vmatpush1.msra.mxu0 %v108
    %701 = vmatprep.subr.mxu0 %v105
    %702 = vmatpush1.msra.mxu0 %v104
    %703 = vmatprep.subr.mxu0 %v101
    %704 = vmatpush1.msra.mxu0 %v100
    %705 = vmatprep.subr.mxu0 %v97
    %706 = vmatpush1.msra.mxu0 %v96
    %707 = vmatprep.subr.mxu0 %v93
    %708 = vmatpush1.msra.mxu0 %v92
    %709 = vmatprep.subr.mxu0 %v89
    %710 = vmatpush1.msra.mxu0 %v88
    %711 = vmatprep.subr.mxu0 %v85
    %712 = vmatpush1.msra.mxu0 %v84
    %713 = vmatprep.subr.mxu0 %v81
    %714 = vmatpush1.msra.mxu0 %v80
    %715 = vmatprep.subr.mxu0 %v77
    %716 = vmatpush1.msra.mxu0 %v76
    %717 = vmatprep.subr.mxu0 %v73
    %718 = vmatpush1.msra.mxu0 %v72
    %719 = vmatprep.subr.mxu0 %v69
    %720 = vmatpush1.msra.mxu0 %v68
    %721 = vmatprep.subr.mxu0 %v65
    %722 = vmatpush1.msra.mxu0 %v64
    %723 = vmatprep.subr.mxu0 %v61
    %724 = vmatpush1.msra.mxu0 %v60
    %725 = vmatprep.subr.mxu0 %v57
    %726 = vmatpush1.msra.mxu0 %v56
    %727 = vmatprep.subr.mxu0 %v53
    %728 = vmatpush1.msra.mxu0 %v52
    %729 = vmatprep.subr.mxu0 %v49
    %730 = vmatpush1.msra.mxu0 %v48
    %731 = vmatprep.subr.mxu0 0.0
    %732 = vmatpush2.msra.mxu0 0.0
    %733 = vmatprep.subr.mxu0 0.0
    %734 = vmatpush2.msra.mxu0 0.0
    %735 = vmatprep.subr.mxu0 0.0
    %736 = vmatpush2.msra.mxu0 0.0
    %737 = vmatprep.subr.mxu0 0.0
    %738 = vmatpush2.msra.mxu0 0.0
    %739 = vmatprep.subr.mxu0 0.0
    %740 = vmatpush2.msra.mxu0 0.0
    %741 = vmatprep.subr.mxu0 0.0
    %742 = vmatpush2.msra.mxu0 0.0
    %743 = vmatprep.subr.mxu0 0.0
    %744 = vmatpush2.msra.mxu0 0.0
    %745 = vmatprep.subr.mxu0 0.0
    %746 = vmatpush2.msra.mxu0 0.0
    %747 = vmatprep.subr.mxu0 0.0
    %748 = vmatpush2.msra.mxu0 0.0
    %749 = vmatprep.subr.mxu0 0.0
    %750 = vmatpush2.msra.mxu0 0.0
    %751 = vmatprep.subr.mxu0 0.0
    %752 = vmatpush2.msra.mxu0 0.0
    %753 = vmatprep.subr.mxu0 0.0
    %754 = vmatpush2.msra.mxu0 0.0
    %755 = vmatprep.subr.mxu0 0.0
    %756 = vmatpush2.msra.mxu0 0.0
    %757 = vmatprep.subr.mxu0 0.0
    %758 = vmatpush2.msra.mxu0 0.0
    %759 = vmatprep.subr.mxu0 0.0
    %760 = vmatpush2.msra.mxu0 0.0
    %761 = vmatprep.subr.mxu0 0.0
    %762 = vmatpush2.msra.mxu0 0.0
    %763 = vmatprep.mubr.f32.mxu0 0.0
    %764 = vmatmul.mubr.f32.gmra.mxu0 %v620
    %v765 = vpop.f32.mrf.mxu0
    %v766 = vadd.f32 0.0, %v765
    %v767 = vpop.f32.mrf.mxu0
    %v768 = vadd.f32 0.0, %v767
    %769 = vdwg.mxu0
    %v770 = vadd.f32 %v624, %v695
    %v771 = vadd.f32 %v625, %v697
    %v772 = vadd.f32 %v626, %v766
    %v773 = vadd.f32 %v627, %v768
    %v774 = vmul.f32 %v770, 0.5
    %v775 = vmul.f32 %v771, 0.5
    %v776 = vmul.f32 %v772, 0.5
    %v777 = vtanh.pop %v774
    %v778 = vtanh.pop %v775
    %v779 = vtanh.pop %v776
    %v780 = vmul.f32 %v777, 0.5
    %v781 = vmul.f32 %v778, 0.5
    %v782 = vmul.f32 %v779, 0.5
    %v783 = vadd.f32 %v780, 0.5
    %v784 = vadd.f32 %v781, 0.5
    %v785 = vadd.f32 %v782, 0.5
    %v786 = vtanh.pop %v773
    %v787 = vmul.f32 %v784, %v618
    %v788 = vmul.f32 %v783, %v786
    %v789 = vadd.f32 %v787, %v788
    %v790 = vtanh.pop %v789
    %v791 = vmul.f32 %v785, %v790
    %s792 = scalar_lea.vmem [#allocation9], 24
    %793 = vst [vmem:[%s792] sm:$0xff] %v791
    %s794 = scalar_lea.vmem [#allocation4], 128
    %v795 = vld [vmem:[%s794] sm:$0xff]
    %v796 = vld [vmem:[%s794 + $0x8] sm:$0xff]
    %v797 = vld [vmem:[%s794 + $0x10] sm:$0xff]
    %v798 = vld [vmem:[%s794 + $0x18] sm:$0xff]
    %799 = vmatprep.subr.mxu0 %v107
    %800 = vmatpush1.msra.mxu0 %v106
    %801 = vmatprep.subr.mxu0 %v103
    %802 = vmatpush1.msra.mxu0 %v102
    %803 = vmatprep.subr.mxu0 %v99
    %804 = vmatpush1.msra.mxu0 %v98
    %805 = vmatprep.subr.mxu0 %v95
    %806 = vmatpush1.msra.mxu0 %v94
    %807 = vmatprep.subr.mxu0 %v91
    %808 = vmatpush1.msra.mxu0 %v90
    %809 = vmatprep.subr.mxu0 %v87
    %810 = vmatpush1.msra.mxu0 %v86
    %811 = vmatprep.subr.mxu0 %v83
    %812 = vmatpush1.msra.mxu0 %v82
    %813 = vmatprep.subr.mxu0 %v79
    %814 = vmatpush1.msra.mxu0 %v78
    %815 = vmatprep.subr.mxu0 %v75
    %816 = vmatpush1.msra.mxu0 %v74
    %817 = vmatprep.subr.mxu0 %v71
    %818 = vmatpush1.msra.mxu0 %v70
    %819 = vmatprep.subr.mxu0 %v67
    %820 = vmatpush1.msra.mxu0 %v66
    %821 = vmatprep.subr.mxu0 %v63
    %822 = vmatpush1.msra.mxu0 %v62
    %823 = vmatprep.subr.mxu0 %v59
    %824 = vmatpush1.msra.mxu0 %v58
    %825 = vmatprep.subr.mxu0 %v55
    %826 = vmatpush1.msra.mxu0 %v54
    %827 = vmatprep.subr.mxu0 %v51
    %828 = vmatpush1.msra.mxu0 %v50
    %829 = vmatprep.subr.mxu0 %v47
    %830 = vmatpush1.msra.mxu0 %v46
    %831 = vmatprep.subr.mxu0 0.0
    %832 = vmatpush2.msra.mxu0 0.0
    %833 = vmatprep.subr.mxu0 0.0
    %834 = vmatpush2.msra.mxu0 0.0
    %835 = vmatprep.subr.mxu0 0.0
    %836 = vmatpush2.msra.mxu0 0.0
    %837 = vmatprep.subr.mxu0 0.0
    %838 = vmatpush2.msra.mxu0 0.0
    %839 = vmatprep.subr.mxu0 0.0
    %840 = vmatpush2.msra.mxu0 0.0
    %841 = vmatprep.subr.mxu0 0.0
    %842 = vmatpush2.msra.mxu0 0.0
    %843 = vmatprep.subr.mxu0 0.0
    %844 = vmatpush2.msra.mxu0 0.0
    %845 = vmatprep.subr.mxu0 0.0
    %846 = vmatpush2.msra.mxu0 0.0
    %847 = vmatprep.subr.mxu0 0.0
    %848 = vmatpush2.msra.mxu0 0.0
    %849 = vmatprep.subr.mxu0 0.0
    %850 = vmatpush2.msra.mxu0 0.0
    %851 = vmatprep.subr.mxu0 0.0
    %852 = vmatpush2.msra.mxu0 0.0
    %853 = vmatprep.subr.mxu0 0.0
    %854 = vmatpush2.msra.mxu0 0.0
    %855 = vmatprep.subr.mxu0 0.0
    %856 = vmatpush2.msra.mxu0 0.0
    %857 = vmatprep.subr.mxu0 0.0
    %858 = vmatpush2.msra.mxu0 0.0
    %859 = vmatprep.subr.mxu0 0.0
    %860 = vmatpush2.msra.mxu0 0.0
    %861 = vmatprep.subr.mxu0 0.0
    %862 = vmatpush2.msra.mxu0 0.0
    %863 = vmatprep.mubr.f32.mxu0 0.0
    %864 = vmatmul.mubr.f32.gmra.mxu0 %v791
    %v865 = vpop.f32.mrf.mxu0
    %v866 = vadd.f32 0.0, %v865
    %v867 = vpop.f32.mrf.mxu0
    %v868 = vadd.f32 0.0, %v867
    %869 = vdwg.mxu0
    %870 = vmatprep.subr.mxu0 %v109
    %871 = vmatpush1.msra.mxu0 %v108
    %872 = vmatprep.subr.mxu0 %v105
    %873 = vmatpush1.msra.mxu0 %v104
    %874 = vmatprep.subr.mxu0 %v101
    %875 = vmatpush1.msra.mxu0 %v100
    %876 = vmatprep.subr.mxu0 %v97
    %877 = vmatpush1.msra.mxu0 %v96
    %878 = vmatprep.subr.mxu0 %v93
    %879 = vmatpush1.msra.mxu0 %v92
    %880 = vmatprep.subr.mxu0 %v89
    %881 = vmatpush1.msra.mxu0 %v88
    %882 = vmatprep.subr.mxu0 %v85
    %883 = vmatpush1.msra.mxu0 %v84
    %884 = vmatprep.subr.mxu0 %v81
    %885 = vmatpush1.msra.mxu0 %v80
    %886 = vmatprep.subr.mxu0 %v77
    %887 = vmatpush1.msra.mxu0 %v76
    %888 = vmatprep.subr.mxu0 %v73
    %889 = vmatpush1.msra.mxu0 %v72
    %890 = vmatprep.subr.mxu0 %v69
    %891 = vmatpush1.msra.mxu0 %v68
    %892 = vmatprep.subr.mxu0 %v65
    %893 = vmatpush1.msra.mxu0 %v64
    %894 = vmatprep.subr.mxu0 %v61
    %895 = vmatpush1.msra.mxu0 %v60
    %896 = vmatprep.subr.mxu0 %v57
    %897 = vmatpush1.msra.mxu0 %v56
    %898 = vmatprep.subr.mxu0 %v53
    %899 = vmatpush1.msra.mxu0 %v52
    %900 = vmatprep.subr.mxu0 %v49
    %901 = vmatpush1.msra.mxu0 %v48
    %902 = vmatprep.subr.mxu0 0.0
    %903 = vmatpush2.msra.mxu0 0.0
    %904 = vmatprep.subr.mxu0 0.0
    %905 = vmatpush2.msra.mxu0 0.0
    %906 = vmatprep.subr.mxu0 0.0
    %907 = vmatpush2.msra.mxu0 0.0
    %908 = vmatprep.subr.mxu0 0.0
    %909 = vmatpush2.msra.mxu0 0.0
    %910 = vmatprep.subr.mxu0 0.0
    %911 = vmatpush2.msra.mxu0 0.0
    %912 = vmatprep.subr.mxu0 0.0
    %913 = vmatpush2.msra.mxu0 0.0
    %914 = vmatprep.subr.mxu0 0.0
    %915 = vmatpush2.msra.mxu0 0.0
    %916 = vmatprep.subr.mxu0 0.0
    %917 = vmatpush2.msra.mxu0 0.0
    %918 = vmatprep.subr.mxu0 0.0
    %919 = vmatpush2.msra.mxu0 0.0
    %920 = vmatprep.subr.mxu0 0.0
    %921 = vmatpush2.msra.mxu0 0.0
    %922 = vmatprep.subr.mxu0 0.0
    %923 = vmatpush2.msra.mxu0 0.0
    %924 = vmatprep.subr.mxu0 0.0
    %925 = vmatpush2.msra.mxu0 0.0
    %926 = vmatprep.subr.mxu0 0.0
    %927 = vmatpush2.msra.mxu0 0.0
    %928 = vmatprep.subr.mxu0 0.0
    %929 = vmatpush2.msra.mxu0 0.0
    %930 = vmatprep.subr.mxu0 0.0
    %931 = vmatpush2.msra.mxu0 0.0
    %932 = vmatprep.subr.mxu0 0.0
    %933 = vmatpush2.msra.mxu0 0.0
    %934 = vmatprep.mubr.f32.mxu0 0.0
    %935 = vmatmul.mubr.f32.gmra.mxu0 %v791
    %v936 = vpop.f32.mrf.mxu0
    %v937 = vadd.f32 0.0, %v936
    %v938 = vpop.f32.mrf.mxu0
    %v939 = vadd.f32 0.0, %v938
    %940 = vdwg.mxu0
    %v941 = vadd.f32 %v795, %v866
    %v942 = vadd.f32 %v796, %v868
    %v943 = vadd.f32 %v797, %v937
    %v944 = vadd.f32 %v798, %v939
    %v945 = vmul.f32 %v941, 0.5
    %v946 = vmul.f32 %v942, 0.5
    %v947 = vmul.f32 %v943, 0.5
    %v948 = vtanh.pop %v945
    %v949 = vtanh.pop %v946
    %v950 = vtanh.pop %v947
    %v951 = vmul.f32 %v948, 0.5
    %v952 = vmul.f32 %v949, 0.5
    %v953 = vmul.f32 %v950, 0.5
    %v954 = vadd.f32 %v951, 0.5
    %v955 = vadd.f32 %v952, 0.5
    %v956 = vadd.f32 %v953, 0.5
    %v957 = vtanh.pop %v944
    %v958 = vmul.f32 %v955, %v789
    %v959 = vmul.f32 %v954, %v957
    %v960 = vadd.f32 %v958, %v959
    %v961 = vtanh.pop %v960
    %v962 = vmul.f32 %v956, %v961
    %s963 = scalar_lea.vmem [#allocation9], 32
    %964 = vst [vmem:[%s963] sm:$0xff] %v962
    %s965 = scalar_lea.vmem [#allocation4], 160
    %v966 = vld [vmem:[%s965] sm:$0xff]
    %v967 = vld [vmem:[%s965 + $0x8] sm:$0xff]
    %v968 = vld [vmem:[%s965 + $0x10] sm:$0xff]
    %v969 = vld [vmem:[%s965 + $0x18] sm:$0xff]
    %970 = vmatprep.subr.mxu0 %v107
    %971 = vmatpush1.msra.mxu0 %v106
    %972 = vmatprep.subr.mxu0 %v103
    %973 = vmatpush1.msra.mxu0 %v102
    %974 = vmatprep.subr.mxu0 %v99
    %975 = vmatpush1.msra.mxu0 %v98
    %976 = vmatprep.subr.mxu0 %v95
    %977 = vmatpush1.msra.mxu0 %v94
    %978 = vmatprep.subr.mxu0 %v91
    %979 = vmatpush1.msra.mxu0 %v90
    %980 = vmatprep.subr.mxu0 %v87
    %981 = vmatpush1.msra.mxu0 %v86
    %982 = vmatprep.subr.mxu0 %v83
    %983 = vmatpush1.msra.mxu0 %v82
    %984 = vmatprep.subr.mxu0 %v79
    %985 = vmatpush1.msra.mxu0 %v78
    %986 = vmatprep.subr.mxu0 %v75
    %987 = vmatpush1.msra.mxu0 %v74
    %988 = vmatprep.subr.mxu0 %v71
    %989 = vmatpush1.msra.mxu0 %v70
    %990 = vmatprep.subr.mxu0 %v67
    %991 = vmatpush1.msra.mxu0 %v66
    %992 = vmatprep.subr.mxu0 %v63
    %993 = vmatpush1.msra.mxu0 %v62
    %994 = vmatprep.subr.mxu0 %v59
    %995 = vmatpush1.msra.mxu0 %v58
    %996 = vmatprep.subr.mxu0 %v55
    %997 = vmatpush1.msra.mxu0 %v54
    %998 = vmatprep.subr.mxu0 %v51
    %999 = vmatpush1.msra.mxu0 %v50
    %1000 = vmatprep.subr.mxu0 %v47
    %1001 = vmatpush1.msra.mxu0 %v46
    %1002 = vmatprep.subr.mxu0 0.0
    %1003 = vmatpush2.msra.mxu0 0.0
    %1004 = vmatprep.subr.mxu0 0.0
    %1005 = vmatpush2.msra.mxu0 0.0
    %1006 = vmatprep.subr.mxu0 0.0
    %1007 = vmatpush2.msra.mxu0 0.0
    %1008 = vmatprep.subr.mxu0 0.0
    %1009 = vmatpush2.msra.mxu0 0.0
    %1010 = vmatprep.subr.mxu0 0.0
    %1011 = vmatpush2.msra.mxu0 0.0
    %1012 = vmatprep.subr.mxu0 0.0
    %1013 = vmatpush2.msra.mxu0 0.0
    %1014 = vmatprep.subr.mxu0 0.0
    %1015 = vmatpush2.msra.mxu0 0.0
    %1016 = vmatprep.subr.mxu0 0.0
    %1017 = vmatpush2.msra.mxu0 0.0
    %1018 = vmatprep.subr.mxu0 0.0
    %1019 = vmatpush2.msra.mxu0 0.0
    %1020 = vmatprep.subr.mxu0 0.0
    %1021 = vmatpush2.msra.mxu0 0.0
    %1022 = vmatprep.subr.mxu0 0.0
    %1023 = vmatpush2.msra.mxu0 0.0
    %1024 = vmatprep.subr.mxu0 0.0
    %1025 = vmatpush2.msra.mxu0 0.0
    %1026 = vmatprep.subr.mxu0 0.0
    %1027 = vmatpush2.msra.mxu0 0.0
    %1028 = vmatprep.subr.mxu0 0.0
    %1029 = vmatpush2.msra.mxu0 0.0
    %1030 = vmatprep.subr.mxu0 0.0
    %1031 = vmatpush2.msra.mxu0 0.0
    %1032 = vmatprep.subr.mxu0 0.0
    %1033 = vmatpush2.msra.mxu0 0.0
    %1034 = vmatprep.mubr.f32.mxu0 0.0
    %1035 = vmatmul.mubr.f32.gmra.mxu0 %v962
    %v1036 = vpop.f32.mrf.mxu0
    %v1037 = vadd.f32 0.0, %v1036
    %v1038 = vpop.f32.mrf.mxu0
    %v1039 = vadd.f32 0.0, %v1038
    %1040 = vdwg.mxu0
    %1041 = vmatprep.subr.mxu0 %v109
    %1042 = vmatpush1.msra.mxu0 %v108
    %1043 = vmatprep.subr.mxu0 %v105
    %1044 = vmatpush1.msra.mxu0 %v104
    %1045 = vmatprep.subr.mxu0 %v101
    %1046 = vmatpush1.msra.mxu0 %v100
    %1047 = vmatprep.subr.mxu0 %v97
    %1048 = vmatpush1.msra.mxu0 %v96
    %1049 = vmatprep.subr.mxu0 %v93
    %1050 = vmatpush1.msra.mxu0 %v92
    %1051 = vmatprep.subr.mxu0 %v89
    %1052 = vmatpush1.msra.mxu0 %v88
    %1053 = vmatprep.subr.mxu0 %v85
    %1054 = vmatpush1.msra.mxu0 %v84
    %1055 = vmatprep.subr.mxu0 %v81
    %1056 = vmatpush1.msra.mxu0 %v80
    %1057 = vmatprep.subr.mxu0 %v77
    %1058 = vmatpush1.msra.mxu0 %v76
    %1059 = vmatprep.subr.mxu0 %v73
    %1060 = vmatpush1.msra.mxu0 %v72
    %1061 = vmatprep.subr.mxu0 %v69
    %1062 = vmatpush1.msra.mxu0 %v68
    %1063 = vmatprep.subr.mxu0 %v65
    %1064 = vmatpush1.msra.mxu0 %v64
    %1065 = vmatprep.subr.mxu0 %v61
    %1066 = vmatpush1.msra.mxu0 %v60
    %1067 = vmatprep.subr.mxu0 %v57
    %1068 = vmatpush1.msra.mxu0 %v56
    %1069 = vmatprep.subr.mxu0 %v53
    %1070 = vmatpush1.msra.mxu0 %v52
    %1071 = vmatprep.subr.mxu0 %v49
    %1072 = vmatpush1.msra.mxu0 %v48
    %1073 = vmatprep.subr.mxu0 0.0
    %1074 = vmatpush2.msra.mxu0 0.0
    %1075 = vmatprep.subr.mxu0 0.0
    %1076 = vmatpush2.msra.mxu0 0.0
    %1077 = vmatprep.subr.mxu0 0.0
    %1078 = vmatpush2.msra.mxu0 0.0
    %1079 = vmatprep.subr.mxu0 0.0
    %1080 = vmatpush2.msra.mxu0 0.0
    %1081 = vmatprep.subr.mxu0 0.0
    %1082 = vmatpush2.msra.mxu0 0.0
    %1083 = vmatprep.subr.mxu0 0.0
    %1084 = vmatpush2.msra.mxu0 0.0
    %1085 = vmatprep.subr.mxu0 0.0
    %1086 = vmatpush2.msra.mxu0 0.0
    %1087 = vmatprep.subr.mxu0 0.0
    %1088 = vmatpush2.msra.mxu0 0.0
    %1089 = vmatprep.subr.mxu0 0.0
    %1090 = vmatpush2.msra.mxu0 0.0
    %1091 = vmatprep.subr.mxu0 0.0
    %1092 = vmatpush2.msra.mxu0 0.0
    %1093 = vmatprep.subr.mxu0 0.0
    %1094 = vmatpush2.msra.mxu0 0.0
    %1095 = vmatprep.subr.mxu0 0.0
    %1096 = vmatpush2.msra.mxu0 0.0
    %1097 = vmatprep.subr.mxu0 0.0
    %1098 = vmatpush2.msra.mxu0 0.0
    %1099 = vmatprep.subr.mxu0 0.0
    %1100 = vmatpush2.msra.mxu0 0.0
    %1101 = vmatprep.subr.mxu0 0.0
    %1102 = vmatpush2.msra.mxu0 0.0
    %1103 = vmatprep.subr.mxu0 0.0
    %1104 = vmatpush2.msra.mxu0 0.0
    %1105 = vmatprep.mubr.f32.mxu0 0.0
    %1106 = vmatmul.mubr.f32.gmra.mxu0 %v962
    %v1107 = vpop.f32.mrf.mxu0
    %v1108 = vadd.f32 0.0, %v1107
    %v1109 = vpop.f32.mrf.mxu0
    %v1110 = vadd.f32 0.0, %v1109
    %1111 = vdwg.mxu0
    %v1112 = vadd.f32 %v966, %v1037
    %v1113 = vadd.f32 %v967, %v1039
    %v1114 = vadd.f32 %v968, %v1108
    %v1115 = vadd.f32 %v969, %v1110
    %v1116 = vmul.f32 %v1112, 0.5
    %v1117 = vmul.f32 %v1113, 0.5
    %v1118 = vmul.f32 %v1114, 0.5
    %v1119 = vtanh.pop %v1116
    %v1120 = vtanh.pop %v1117
    %v1121 = vtanh.pop %v1118
    %v1122 = vmul.f32 %v1119, 0.5
    %v1123 = vmul.f32 %v1120, 0.5
    %v1124 = vmul.f32 %v1121, 0.5
    %v1125 = vadd.f32 %v1122, 0.5
    %v1126 = vadd.f32 %v1123, 0.5
    %v1127 = vadd.f32 %v1124, 0.5
    %v1128 = vtanh.pop %v1115
    %v1129 = vmul.f32 %v1126, %v960
    %v1130 = vmul.f32 %v1125, %v1128
    %v1131 = vadd.f32 %v1129, %v1130
    %v1132 = vtanh.pop %v1131
    %v1133 = vmul.f32 %v1127, %v1132
    %s1134 = scalar_lea.vmem [#allocation9], 40
    %1135 = vst [vmem:[%s1134] sm:$0xff] %v1133
    %s1136 = scalar_lea.vmem [#allocation4], 192
    %v1137 = vld [vmem:[%s1136] sm:$0xff]
    %v1138 = vld [vmem:[%s1136 + $0x8] sm:$0xff]
    %v1139 = vld [vmem:[%s1136 + $0x10] sm:$0xff]
    %v1140 = vld [vmem:[%s1136 + $0x18] sm:$0xff]
    %1141 = vmatprep.subr.mxu0 %v107
    %1142 = vmatpush1.msra.mxu0 %v106
    %1143 = vmatprep.subr.mxu0 %v103
    %1144 = vmatpush1.msra.mxu0 %v102
    %1145 = vmatprep.subr.mxu0 %v99
    %1146 = vmatpush1.msra.mxu0 %v98
    %1147 = vmatprep.subr.mxu0 %v95
    %1148 = vmatpush1.msra.mxu0 %v94
    %1149 = vmatprep.subr.mxu0 %v91
    %1150 = vmatpush1.msra.mxu0 %v90
    %1151 = vmatprep.subr.mxu0 %v87
    %1152 = vmatpush1.msra.mxu0 %v86
    %1153 = vmatprep.subr.mxu0 %v83
    %1154 = vmatpush1.msra.mxu0 %v82
    %1155 = vmatprep.subr.mxu0 %v79
    %1156 = vmatpush1.msra.mxu0 %v78
    %1157 = vmatprep.subr.mxu0 %v75
    %1158 = vmatpush1.msra.mxu0 %v74
    %1159 = vmatprep.subr.mxu0 %v71
    %1160 = vmatpush1.msra.mxu0 %v70
    %1161 = vmatprep.subr.mxu0 %v67
    %1162 = vmatpush1.msra.mxu0 %v66
    %1163 = vmatprep.subr.mxu0 %v63
    %1164 = vmatpush1.msra.mxu0 %v62
    %1165 = vmatprep.subr.mxu0 %v59
    %1166 = vmatpush1.msra.mxu0 %v58
    %1167 = vmatprep.subr.mxu0 %v55
    %1168 = vmatpush1.msra.mxu0 %v54
    %1169 = vmatprep.subr.mxu0 %v51
    %1170 = vmatpush1.msra.mxu0 %v50
    %1171 = vmatprep.subr.mxu0 %v47
    %1172 = vmatpush1.msra.mxu0 %v46
    %1173 = vmatprep.subr.mxu0 0.0
    %1174 = vmatpush2.msra.mxu0 0.0
    %1175 = vmatprep.subr.mxu0 0.0
    %1176 = vmatpush2.msra.mxu0 0.0
    %1177 = vmatprep.subr.mxu0 0.0
    %1178 = vmatpush2.msra.mxu0 0.0
    %1179 = vmatprep.subr.mxu0 0.0
    %1180 = vmatpush2.msra.mxu0 0.0
    %1181 = vmatprep.subr.mxu0 0.0
    %1182 = vmatpush2.msra.mxu0 0.0
    %1183 = vmatprep.subr.mxu0 0.0
    %1184 = vmatpush2.msra.mxu0 0.0
    %1185 = vmatprep.subr.mxu0 0.0
    %1186 = vmatpush2.msra.mxu0 0.0
    %1187 = vmatprep.subr.mxu0 0.0
    %1188 = vmatpush2.msra.mxu0 0.0
    %1189 = vmatprep.subr.mxu0 0.0
    %1190 = vmatpush2.msra.mxu0 0.0
    %1191 = vmatprep.subr.mxu0 0.0
    %1192 = vmatpush2.msra.mxu0 0.0
    %1193 = vmatprep.subr.mxu0 0.0
    %1194 = vmatpush2.msra.mxu0 0.0
    %1195 = vmatprep.subr.mxu0 0.0
    %1196 = vmatpush2.msra.mxu0 0.0
    %1197 = vmatprep.subr.mxu0 0.0
    %1198 = vmatpush2.msra.mxu0 0.0
    %1199 = vmatprep.subr.mxu0 0.0
    %1200 = vmatpush2.msra.mxu0 0.0
    %1201 = vmatprep.subr.mxu0 0.0
    %1202 = vmatpush2.msra.mxu0 0.0
    %1203 = vmatprep.subr.mxu0 0.0
    %1204 = vmatpush2.msra.mxu0 0.0
    %1205 = vmatprep.mubr.f32.mxu0 0.0
    %1206 = vmatmul.mubr.f32.gmra.mxu0 %v1133
    %v1207 = vpop.f32.mrf.mxu0
    %v1208 = vadd.f32 0.0, %v1207
    %v1209 = vpop.f32.mrf.mxu0
    %v1210 = vadd.f32 0.0, %v1209
    %1211 = vdwg.mxu0
    %1212 = vmatprep.subr.mxu0 %v109
    %1213 = vmatpush1.msra.mxu0 %v108
    %1214 = vmatprep.subr.mxu0 %v105
    %1215 = vmatpush1.msra.mxu0 %v104
    %1216 = vmatprep.subr.mxu0 %v101
    %1217 = vmatpush1.msra.mxu0 %v100
    %1218 = vmatprep.subr.mxu0 %v97
    %1219 = vmatpush1.msra.mxu0 %v96
    %1220 = vmatprep.subr.mxu0 %v93
    %1221 = vmatpush1.msra.mxu0 %v92
    %1222 = vmatprep.subr.mxu0 %v89
    %1223 = vmatpush1.msra.mxu0 %v88
    %1224 = vmatprep.subr.mxu0 %v85
    %1225 = vmatpush1.msra.mxu0 %v84
    %1226 = vmatprep.subr.mxu0 %v81
    %1227 = vmatpush1.msra.mxu0 %v80
    %1228 = vmatprep.subr.mxu0 %v77
    %1229 = vmatpush1.msra.mxu0 %v76
    %1230 = vmatprep.subr.mxu0 %v73
    %1231 = vmatpush1.msra.mxu0 %v72
    %1232 = vmatprep.subr.mxu0 %v69
    %1233 = vmatpush1.msra.mxu0 %v68
    %1234 = vmatprep.subr.mxu0 %v65
    %1235 = vmatpush1.msra.mxu0 %v64
    %1236 = vmatprep.subr.mxu0 %v61
    %1237 = vmatpush1.msra.mxu0 %v60
    %1238 = vmatprep.subr.mxu0 %v57
    %1239 = vmatpush1.msra.mxu0 %v56
    %1240 = vmatprep.subr.mxu0 %v53
    %1241 = vmatpush1.msra.mxu0 %v52
    %1242 = vmatprep.subr.mxu0 %v49
    %1243 = vmatpush1.msra.mxu0 %v48
    %1244 = vmatprep.subr.mxu0 0.0
    %1245 = vmatpush2.msra.mxu0 0.0
    %1246 = vmatprep.subr.mxu0 0.0
    %1247 = vmatpush2.msra.mxu0 0.0
    %1248 = vmatprep.subr.mxu0 0.0
    %1249 = vmatpush2.msra.mxu0 0.0
    %1250 = vmatprep.subr.mxu0 0.0
    %1251 = vmatpush2.msra.mxu0 0.0
    %1252 = vmatprep.subr.mxu0 0.0
    %1253 = vmatpush2.msra.mxu0 0.0
    %1254 = vmatprep.subr.mxu0 0.0
    %1255 = vmatpush2.msra.mxu0 0.0
    %1256 = vmatprep.subr.mxu0 0.0
    %1257 = vmatpush2.msra.mxu0 0.0
    %1258 = vmatprep.subr.mxu0 0.0
    %1259 = vmatpush2.msra.mxu0 0.0
    %1260 = vmatprep.subr.mxu0 0.0
    %1261 = vmatpush2.msra.mxu0 0.0
    %1262 = vmatprep.subr.mxu0 0.0
    %1263 = vmatpush2.msra.mxu0 0.0
    %1264 = vmatprep.subr.mxu0 0.0
    %1265 = vmatpush2.msra.mxu0 0.0
    %1266 = vmatprep.subr.mxu0 0.0
    %1267 = vmatpush2.msra.mxu0 0.0
    %1268 = vmatprep.subr.mxu0 0.0
    %1269 = vmatpush2.msra.mxu0 0.0
    %1270 = vmatprep.subr.mxu0 0.0
    %1271 = vmatpush2.msra.mxu0 0.0
    %1272 = vmatprep.subr.mxu0 0.0
    %1273 = vmatpush2.msra.mxu0 0.0
    %1274 = vmatprep.subr.mxu0 0.0
    %1275 = vmatpush2.msra.mxu0 0.0
    %1276 = vmatprep.mubr.f32.mxu0 0.0
    %1277 = vmatmul.mubr.f32.gmra.mxu0 %v1133
    %v1278 = vpop.f32.mrf.mxu0
    %v1279 = vadd.f32 0.0, %v1278
    %v1280 = vpop.f32.mrf.mxu0
    %v1281 = vadd.f32 0.0, %v1280
    %1282 = vdwg.mxu0
    %v1283 = vadd.f32 %v1137, %v1208
    %v1284 = vadd.f32 %v1138, %v1210
    %v1285 = vadd.f32 %v1139, %v1279
    %v1286 = vadd.f32 %v1140, %v1281
    %v1287 = vmul.f32 %v1283, 0.5
    %v1288 = vmul.f32 %v1284, 0.5
    %v1289 = vmul.f32 %v1285, 0.5
    %v1290 = vtanh.pop %v1287
    %v1291 = vtanh.pop %v1288
    %v1292 = vtanh.pop %v1289
    %v1293 = vmul.f32 %v1290, 0.5
    %v1294 = vmul.f32 %v1291, 0.5
    %v1295 = vmul.f32 %v1292, 0.5
    %v1296 = vadd.f32 %v1293, 0.5
    %v1297 = vadd.f32 %v1294, 0.5
    %v1298 = vadd.f32 %v1295, 0.5
    %v1299 = vtanh.pop %v1286
    %v1300 = vmul.f32 %v1297, %v1131
    %v1301 = vmul.f32 %v1296, %v1299
    %v1302 = vadd.f32 %v1300, %v1301
    %v1303 = vtanh.pop %v1302
    %v1304 = vmul.f32 %v1298, %v1303
    %s1305 = scalar_lea.vmem [#allocation9], 48
    %1306 = vst [vmem:[%s1305] sm:$0xff] %v1304
    %s1307 = scalar_lea.vmem [#allocation4], 224
    %v1308 = vld [vmem:[%s1307] sm:$0xff]
    %v1309 = vld [vmem:[%s1307 + $0x8] sm:$0xff]
    %v1310 = vld [vmem:[%s1307 + $0x10] sm:$0xff]
    %v1311 = vld [vmem:[%s1307 + $0x18] sm:$0xff]
    %1312 = vmatprep.subr.mxu0 %v107
    %1313 = vmatpush1.msra.mxu0 %v106
    %1314 = vmatprep.subr.mxu0 %v103
    %1315 = vmatpush1.msra.mxu0 %v102
    %1316 = vmatprep.subr.mxu0 %v99
    %1317 = vmatpush1.msra.mxu0 %v98
    %1318 = vmatprep.subr.mxu0 %v95
    %1319 = vmatpush1.msra.mxu0 %v94
    %1320 = vmatprep.subr.mxu0 %v91
    %1321 = vmatpush1.msra.mxu0 %v90
    %1322 = vmatprep.subr.mxu0 %v87
    %1323 = vmatpush1.msra.mxu0 %v86
    %1324 = vmatprep.subr.mxu0 %v83
    %1325 = vmatpush1.msra.mxu0 %v82
    %1326 = vmatprep.subr.mxu0 %v79
    %1327 = vmatpush1.msra.mxu0 %v78
    %1328 = vmatprep.subr.mxu0 %v75
    %1329 = vmatpush1.msra.mxu0 %v74
    %1330 = vmatprep.subr.mxu0 %v71
    %1331 = vmatpush1.msra.mxu0 %v70
    %1332 = vmatprep.subr.mxu0 %v67
    %1333 = vmatpush1.msra.mxu0 %v66
    %1334 = vmatprep.subr.mxu0 %v63
    %1335 = vmatpush1.msra.mxu0 %v62
    %1336 = vmatprep.subr.mxu0 %v59
    %1337 = vmatpush1.msra.mxu0 %v58
    %1338 = vmatprep.subr.mxu0 %v55
    %1339 = vmatpush1.msra.mxu0 %v54
    %1340 = vmatprep.subr.mxu0 %v51
    %1341 = vmatpush1.msra.mxu0 %v50
    %1342 = vmatprep.subr.mxu0 %v47
    %1343 = vmatpush1.msra.mxu0 %v46
    %1344 = vmatprep.subr.mxu0 0.0
    %1345 = vmatpush2.msra.mxu0 0.0
    %1346 = vmatprep.subr.mxu0 0.0
    %1347 = vmatpush2.msra.mxu0 0.0
    %1348 = vmatprep.subr.mxu0 0.0
    %1349 = vmatpush2.msra.mxu0 0.0
    %1350 = vmatprep.subr.mxu0 0.0
    %1351 = vmatpush2.msra.mxu0 0.0
    %1352 = vmatprep.subr.mxu0 0.0
    %1353 = vmatpush2.msra.mxu0 0.0
    %1354 = vmatprep.subr.mxu0 0.0
    %1355 = vmatpush2.msra.mxu0 0.0
    %1356 = vmatprep.subr.mxu0 0.0
    %1357 = vmatpush2.msra.mxu0 0.0
    %1358 = vmatprep.subr.mxu0 0.0
    %1359 = vmatpush2.msra.mxu0 0.0
    %1360 = vmatprep.subr.mxu0 0.0
    %1361 = vmatpush2.msra.mxu0 0.0
    %1362 = vmatprep.subr.mxu0 0.0
    %1363 = vmatpush2.msra.mxu0 0.0
    %1364 = vmatprep.subr.mxu0 0.0
    %1365 = vmatpush2.msra.mxu0 0.0
    %1366 = vmatprep.subr.mxu0 0.0
    %1367 = vmatpush2.msra.mxu0 0.0
    %1368 = vmatprep.subr.mxu0 0.0
    %1369 = vmatpush2.msra.mxu0 0.0
    %1370 = vmatprep.subr.mxu0 0.0
    %1371 = vmatpush2.msra.mxu0 0.0
    %1372 = vmatprep.subr.mxu0 0.0
    %1373 = vmatpush2.msra.mxu0 0.0
    %1374 = vmatprep.subr.mxu0 0.0
    %1375 = vmatpush2.msra.mxu0 0.0
    %1376 = vmatprep.mubr.f32.mxu0 0.0
    %1377 = vmatmul.mubr.f32.gmra.mxu0 %v1304
    %v1378 = vpop.f32.mrf.mxu0
    %v1379 = vadd.f32 0.0, %v1378
    %v1380 = vpop.f32.mrf.mxu0
    %v1381 = vadd.f32 0.0, %v1380
    %1382 = vdwg.mxu0
    %1383 = vmatprep.subr.mxu0 %v109
    %1384 = vmatpush1.msra.mxu0 %v108
    %1385 = vmatprep.subr.mxu0 %v105
    %1386 = vmatpush1.msra.mxu0 %v104
    %1387 = vmatprep.subr.mxu0 %v101
    %1388 = vmatpush1.msra.mxu0 %v100
    %1389 = vmatprep.subr.mxu0 %v97
    %1390 = vmatpush1.msra.mxu0 %v96
    %1391 = vmatprep.subr.mxu0 %v93
    %1392 = vmatpush1.msra.mxu0 %v92
    %1393 = vmatprep.subr.mxu0 %v89
    %1394 = vmatpush1.msra.mxu0 %v88
    %1395 = vmatprep.subr.mxu0 %v85
    %1396 = vmatpush1.msra.mxu0 %v84
    %1397 = vmatprep.subr.mxu0 %v81
    %1398 = vmatpush1.msra.mxu0 %v80
    %1399 = vmatprep.subr.mxu0 %v77
    %1400 = vmatpush1.msra.mxu0 %v76
    %1401 = vmatprep.subr.mxu0 %v73
    %1402 = vmatpush1.msra.mxu0 %v72
    %1403 = vmatprep.subr.mxu0 %v69
    %1404 = vmatpush1.msra.mxu0 %v68
    %1405 = vmatprep.subr.mxu0 %v65
    %1406 = vmatpush1.msra.mxu0 %v64
    %1407 = vmatprep.subr.mxu0 %v61
    %1408 = vmatpush1.msra.mxu0 %v60
    %1409 = vmatprep.subr.mxu0 %v57
    %1410 = vmatpush1.msra.mxu0 %v56
    %1411 = vmatprep.subr.mxu0 %v53
    %1412 = vmatpush1.msra.mxu0 %v52
    %1413 = vmatprep.subr.mxu0 %v49
    %1414 = vmatpush1.msra.mxu0 %v48
    %1415 = vmatprep.subr.mxu0 0.0
    %1416 = vmatpush2.msra.mxu0 0.0
    %1417 = vmatprep.subr.mxu0 0.0
    %1418 = vmatpush2.msra.mxu0 0.0
    %1419 = vmatprep.subr.mxu0 0.0
    %1420 = vmatpush2.msra.mxu0 0.0
    %1421 = vmatprep.subr.mxu0 0.0
    %1422 = vmatpush2.msra.mxu0 0.0
    %1423 = vmatprep.subr.mxu0 0.0
    %1424 = vmatpush2.msra.mxu0 0.0
    %1425 = vmatprep.subr.mxu0 0.0
    %1426 = vmatpush2.msra.mxu0 0.0
    %1427 = vmatprep.subr.mxu0 0.0
    %1428 = vmatpush2.msra.mxu0 0.0
    %1429 = vmatprep.subr.mxu0 0.0
    %1430 = vmatpush2.msra.mxu0 0.0
    %1431 = vmatprep.subr.mxu0 0.0
    %1432 = vmatpush2.msra.mxu0 0.0
    %1433 = vmatprep.subr.mxu0 0.0
    %1434 = vmatpush2.msra.mxu0 0.0
    %1435 = vmatprep.subr.mxu0 0.0
    %1436 = vmatpush2.msra.mxu0 0.0
    %1437 = vmatprep.subr.mxu0 0.0
    %1438 = vmatpush2.msra.mxu0 0.0
    %1439 = vmatprep.subr.mxu0 0.0
    %1440 = vmatpush2.msra.mxu0 0.0
    %1441 = vmatprep.subr.mxu0 0.0
    %1442 = vmatpush2.msra.mxu0 0.0
    %1443 = vmatprep.subr.mxu0 0.0
    %1444 = vmatpush2.msra.mxu0 0.0
    %1445 = vmatprep.subr.mxu0 0.0
    %1446 = vmatpush2.msra.mxu0 0.0
    %1447 = vmatprep.mubr.f32.mxu0 0.0
    %1448 = vmatmul.mubr.f32.gmra.mxu0 %v1304
    %v1449 = vpop.f32.mrf.mxu0
    %v1450 = vadd.f32 0.0, %v1449
    %v1451 = vpop.f32.mrf.mxu0
    %v1452 = vadd.f32 0.0, %v1451
    %1453 = vdwg.mxu0
    %v1454 = vadd.f32 %v1308, %v1379
    %v1455 = vadd.f32 %v1309, %v1381
    %v1456 = vadd.f32 %v1310, %v1450
    %v1457 = vadd.f32 %v1311, %v1452
    %v1458 = vmul.f32 %v1454, 0.5
    %v1459 = vmul.f32 %v1455, 0.5
    %v1460 = vmul.f32 %v1456, 0.5
    %v1461 = vtanh.pop %v1458
    %v1462 = vtanh.pop %v1459
    %v1463 = vtanh.pop %v1460
    %v1464 = vmul.f32 %v1461, 0.5
    %v1465 = vmul.f32 %v1462, 0.5
    %v1466 = vmul.f32 %v1463, 0.5
    %v1467 = vadd.f32 %v1464, 0.5
    %v1468 = vadd.f32 %v1465, 0.5
    %v1469 = vadd.f32 %v1466, 0.5
    %v1470 = vtanh.pop %v1457
    %v1471 = vmul.f32 %v1468, %v1302
    %v1472 = vmul.f32 %v1467, %v1470
    %v1473 = vadd.f32 %v1471, %v1472
    %v1474 = vtanh.pop %v1473
    %v1475 = vmul.f32 %v1469, %v1474
    %s1476 = scalar_lea.vmem [#allocation9], 56
    %1477 = vst [vmem:[%s1476] sm:$0xff] %v1475
    %1478 = vst [vmem:[#allocation2] sm:$0xff] %v1475
    %1479 = vst [vmem:[#allocation3] sm:$0xff] %v1473
    // Predicated region
    $region22: #{tpu_custom_call.1} parent=1 // pred_check
      _
    $region23: #{tpu_custom_call.1} parent=1 // pred_check_branch
      %1481 = sbr.rel (0) target = $region25
    $region24: #{tpu_custom_call.1} parent=1 // pred_region
      %s1483 = ssub.s32 1024, 1024
      %1484 = vsyncadd [#allocation6], %s1483
      %s1485 = sshll.u32 [#allocation9], 4
      %s1486 = int_to_ptr.vmem [resolvable:$true] %s1485
      %1491 = dma.vmem_to_hbm [thread:$0]  %s1486, 1024, %s2, [#allocation6], 128, 128, 8
    $region25: #{tpu_custom_call.1} parent=1 // pred_fallthru
      _
    // Predicated region
    $region26: #{tpu_custom_call.1} parent=1 // pred_check
      _
    $region27: #{tpu_custom_call.1} parent=1 // pred_check_branch
      %1493 = sbr.rel (0) target = $region29
    $region28: #{tpu_custom_call.1} parent=1 // pred_region
      %1494 = dma.done [#allocation6], 1024
    $region29: #{tpu_custom_call.1} parent=1 // pred_fallthru
      _
    %1495 = vsyncpa [#allocation5], 1
    %1496 = vsyncpa [#allocation8], 1
    %1497 = vsyncpa [#allocation6], 1

</llo_original>
